<compile_context>
chip_gen: v6e
topology: v6e:2x2x1
jax: 0.10.0
libtpu: 0.0.40
codegen_flags: <defaults>
</compile_context>

<pallas_src>
import functools

import jax
import jax.numpy as jnp
from jax.experimental import pallas as pl
from jax.experimental.pallas import tpu as pltpu


CFG = dict(
    object_scale=5.0,
    no_object_scale=1.0,
    anchors="1.3221,1.73145,3.19275,4.00944,5.05587,"
            "8.09892,9.47112,4.84053,11.2364,10.0071",
    coord_scale=1.0,
    sil_thresh=0.6,
    classes=4,
    class_scale=1.0,
    debug=False,
    time=False,
)


def _fullsum(v):
    """(R, C) -> (1, 1) sum."""
    return jnp.sum(jnp.sum(v, axis=-1, keepdims=True), axis=-2, keepdims=True)


# ---------------------------------------------------------------------------
# Fused kernel: activations, grid-offset boxes, silence mask and all dense
# loss reductions.  Outputs are per-batch partial losses (5 scalars).
# ---------------------------------------------------------------------------
def _region_base_kernel(na, NL, FS, noobj, sil, anc_w, anc_h,
                        nlab_ref, gt_ref,                      # SMEM (prefetch)
                        off_ref, p_ref,                        # VMEM inputs
                        lx_ref, ly_ref, lw_ref, lh_ref, lc_ref,  # outputs
                        st_ref):                               # VMEM scratch
    b = pl.program_id(0)     # batch           (parallel)
    si = pl.program_id(1)    # spatial chunk   (arbitrary, accumulated)

    @pl.when(si == 0)
    def _init():
        for r in (lx_ref, ly_ref, lw_ref, lh_ref, lc_ref):
            r[...] = jnp.zeros_like(r)

    offx = off_ref[0:1, :]   # (1, SC) grid-cell x of each position
    offy = off_ref[1:2, :]   # (1, SC) grid-cell y of each position

    lxv = jnp.zeros((1, 1), jnp.float32)
    lyv = jnp.zeros((1, 1), jnp.float32)
    lwv = jnp.zeros((1, 1), jnp.float32)
    lhv = jnp.zeros((1, 1), jnp.float32)

    # --- activations + base coord losses; stage offset boxes per anchor ---
    for a in range(na):
        txy = p_ref[0, a, 0:2, :]            # (2, SC) raw tx, ty
        twh = p_ref[0, a, 2:4, :]            # (2, SC) raw tw, th
        tcf = p_ref[0, a, 4:5, :]            # (1, SC) raw objectness logit

        sxy = jax.nn.sigmoid(txy)
        cf = jax.nn.sigmoid(tcf)
        ewh = jnp.exp(twh)

        dxy = sxy - 0.5                      # target_x/y base is 0.5 (epoch<1)
        s2 = jnp.sum(dxy * dxy, axis=1, keepdims=True)    # (2, 1)
        w2 = jnp.sum(twh * twh, axis=1, keepdims=True)    # (2, 1)
        lxv = lxv + s2[0:1, :]
        lyv = lyv + s2[1:2, :]
        lwv = lwv + w2[0:1, :]
        lhv = lhv + w2[1:2, :]

        px = sxy[0:1, :] + offx
        py = sxy[1:2, :] + offy
        pw = ewh[0:1, :] * anc_w[a]
        ph = ewh[1:2, :] * anc_h[a]
        hx = pw * 0.5
        hy = ph * 0.5

        st_ref[0 * FS + a:0 * FS + a + 1, :] = px - hx
        st_ref[1 * FS + a:1 * FS + a + 1, :] = px + hx
        st_ref[2 * FS + a:2 * FS + a + 1, :] = py - hy
        st_ref[3 * FS + a:3 * FS + a + 1, :] = py + hy
        st_ref[4 * FS + a:4 * FS + a + 1, :] = pw
        st_ref[5 * FS + a:5 * FS + a + 1, :] = ph
        st_ref[6 * FS + a:6 * FS + a + 1, :] = pw * ph
        st_ref[7 * FS + a:7 * FS + a + 1, :] = cf

    # anchor-stacked (na, SC) slabs for the IoU loop
    px_lo = st_ref[0 * FS:0 * FS + na, :]
    px_hi = st_ref[1 * FS:1 * FS + na, :]
    py_lo = st_ref[2 * FS:2 * FS + na, :]
    py_hi = st_ref[3 * FS:3 * FS + na, :]
    pw_all = st_ref[4 * FS:4 * FS + na, :]
    ph_all = st_ref[5 * FS:5 * FS + na, :]
    parea = st_ref[6 * FS:6 * FS + na, :]
    conf = st_ref[7 * FS:7 * FS + na, :]

    # --- silence mask: any gt box with IoU > sil_thresh -------------------
    nl = nlab_ref[b]   # number of valid labels for this image (dynamic)

    def body(l, keep):
        gxs = gt_ref[b, l]
        gys = gt_ref[b, NL + l]
        gws = gt_ref[b, 2 * NL + l]
        ghs = gt_ref[b, 3 * NL + l]
        hw = gws * 0.5
        hh = ghs * 0.5
        mnx = jnp.minimum(px_lo, gxs - hw)
        mxx = jnp.maximum(px_hi, gxs + hw)
        mny = jnp.minimum(py_lo, gys - hh)
        mxy = jnp.maximum(py_hi, gys + hh)
        cw = pw_all + gws - (mxx - mnx)
        ch = ph_all + ghs - (mxy - mny)
        inter = jnp.maximum(cw, 0.0) * jnp.maximum(ch, 0.0)
        union = parea + gws * ghs - inter
        # iou > sil  <=>  inter > sil * union  (union > 0 always) -> no div.
        return jnp.where(inter > sil * union, 0.0, keep)

    keep = jax.lax.fori_loop(0, nl, body, jnp.ones_like(px_lo))
    lcv = noobj * _fullsum(keep * conf * conf)      # base no-object conf loss

    lx_ref[...] = lx_ref[...] + lxv.reshape(1, 1, 1)
    ly_ref[...] = ly_ref[...] + lyv.reshape(1, 1, 1)
    lw_ref[...] = lw_ref[...] + lwv.reshape(1, 1, 1)
    lh_ref[...] = lh_ref[...] + lhv.reshape(1, 1, 1)
    lc_ref[...] = lc_ref[...] + lcv.reshape(1, 1, 1)


# ---------------------------------------------------------------------------
# Wrapper reproducing RegionLoss.forward (epoch = 0, as set in __init__)
# ---------------------------------------------------------------------------
def region_loss(pred, target, cfg=CFG):
    obj_scale = float(cfg["object_scale"])
    noobj = float(cfg["no_object_scale"])
    anc_list = [float(v) for v in cfg["anchors"].split(",")]
    na = len(anc_list) // 2
    anc_w = tuple(anc_list[0::2])
    anc_h = tuple(anc_list[1::2])
    cs = float(cfg["coord_scale"])
    sil = float(cfg["sil_thresh"])
    nc = int(cfg["classes"])
    class_scale = float(cfg["class_scale"])

    pred = pred.astype(jnp.float32)
    target = target.astype(jnp.float32)
    B, C, H, W = pred.shape
    assert C == na * (nc + 5) and H == W
    S = H * W
    NL = target.shape[1]

    pred_r = pred.reshape(B, na, nc + 5, S)      # free reshape (NCHW layout)

    # spatial chunk size (bounds vregs/VMEM for big H*W, pipelines DMA)
    SC = S
    if S > 1024:
        for c in (512, 256, 128):
            if S % c == 0:
                SC = c
                break
    NS = S // SC
    FS = ((na + 7) // 8) * 8                     # sublane-aligned field stride

    # ---- per-label bookkeeping (tiny, O(B*NL), plain JAX) ----------------
    # TODO(synk): this sparse, data-dependent bookkeeping (<=50 boxes/image)
    # stays in plain-JAX glue; only the dense per-position work is a kernel.
    cls_t = target[:, :, 0]
    gx = target[:, :, 1] * W
    gy = target[:, :, 2] * H
    gw = target[:, :, 3] * W
    gh = target[:, :, 4] * H
    valid = jnp.cumprod((target[:, :, 1] != 0).astype(jnp.float32), axis=1)
    validb = valid > 0                                           # "break" mask
    nlab = jnp.sum(validb.astype(jnp.int32), axis=1)             # (B,)
    gt_packed = jnp.concatenate([gx, gy, gw, gh], axis=1)        # (B, 4*NL)

    s_i = jnp.arange(S, dtype=jnp.int32)
    offs_xy = jnp.stack([(s_i % W).astype(jnp.float32),
                         (s_i // W).astype(jnp.float32)], axis=0)  # (2, S)

    # ---- fused dense kernel ----------------------------------------------
    kern = functools.partial(_region_base_kernel, na, NL, FS, noobj, sil,
                             anc_w, anc_h)
    base = pl.pallas_call(
        kern,
        grid_spec=pltpu.PrefetchScalarGridSpec(
            num_scalar_prefetch=2,
            grid=(B, NS),
            in_specs=[
                pl.BlockSpec((2, SC), lambda b, s, nl_r, gt_r: (0, s)),
                pl.BlockSpec((1, na, nc + 5, SC),
                             lambda b, s, nl_r, gt_r: (b, 0, 0, s)),
            ],
            out_specs=[pl.BlockSpec((1, 1, 1),
                                    lambda b, s, nl_r, gt_r: (b, 0, 0))] * 5,
            scratch_shapes=[pltpu.VMEM((8 * FS, SC), jnp.float32)],
        ),
        out_shape=[jax.ShapeDtypeStruct((B, 1, 1), jnp.float32)] * 5,
        compiler_params=pltpu.CompilerParams(
            dimension_semantics=("parallel", "arbitrary")),
    )(nlab, gt_packed, offs_xy, pred_r)
    bx, by, bw, bh, bconf = [jnp.sum(o) for o in base]

    # ---- sparse corrections at the <=NL label cells -----------------------
    anc_w_a = jnp.array(anc_w, jnp.float32)
    anc_h_a = jnp.array(anc_h, jnp.float32)
    inter_a = (jnp.minimum(gw[..., None], anc_w_a) *
               jnp.minimum(gh[..., None], anc_h_a))
    union_a = gw[..., None] * gh[..., None] + anc_w_a * anc_h_a - inter_a
    iou_a = jnp.where(union_a > 0, inter_a / union_a, 0.0)
    best = jnp.argmax(iou_a, axis=-1).astype(jnp.int32)          # (B, NL)
    aw_b = anc_w_a[best]
    ah_b = anc_h_a[best]

    gi = jnp.floor(gx).astype(jnp.int32)
    gj = jnp.floor(gy).astype(jnp.int32)
    gi_c = jnp.clip(gi, 0, W - 1)          # defensive clip (PyTorch would OOB)
    gj_c = jnp.clip(gj, 0, H - 1)
    sp = gj_c * W + gi_c                                         # (B, NL)
    flat = best * S + sp

    # last-writer dedup -> matches the sequential PyTorch scatter exactly
    later = jnp.arange(NL)[None, :] > jnp.arange(NL)[:, None]    # (NL, NL)
    same = flat[:, :, None] == flat[:, None, :]
    overwritten = jnp.any(same & later[None, :, :] & validb[:, None, :], axis=2)
    writer = (validb & ~overwritten).astype(jnp.float32)         # (B, NL)

    # gather raw pred at the (best anchor, gj, gi) cells
    ch_i = jnp.arange(nc + 5, dtype=jnp.int32)
    gflat = ((best * (nc + 5) * S)[:, :, None]
             + ch_i[None, None, :] * S + sp[:, :, None])         # (B, NL, nc+5)
    vals = jnp.take_along_axis(pred.reshape(B, C * S),
                               gflat.reshape(B, NL * (nc + 5)),
                               axis=1).reshape(B, NL, nc + 5)
    sx_l = jax.nn.sigmoid(vals[..., 0])
    sy_l = jax.nn.sigmoid(vals[..., 1])
    tw_l = vals[..., 2]
    th_l = vals[..., 3]
    cf_l = jax.nn.sigmoid(vals[..., 4])
    logits_l = vals[..., 5:]

    pxo = sx_l + gi_c.astype(jnp.float32)
    pyo = sy_l + gj_c.astype(jnp.float32)
    pwo = jnp.exp(tw_l) * aw_b
    pho = jnp.exp(th_l) * ah_b

    # target values written by the (last-writer) labels
    tx_t = gx - jnp.floor(gx)
    ty_t = gy - jnp.floor(gy)
    tw_t = jnp.log(jnp.where(validb, gw / aw_b, 1.0))
    th_t = jnp.log(jnp.where(validb, gh / ah_b, 1.0))

    def _inter_union(px, py, pw, ph, qx, qy, qw, qh):
        mnx = jnp.minimum(px - pw * 0.5, qx - qw * 0.5)
        mxx = jnp.maximum(px + pw * 0.5, qx + qw * 0.5)
        mny = jnp.minimum(py - ph * 0.5, qy - qh * 0.5)
        mxy = jnp.maximum(py + ph * 0.5, qy + qh * 0.5)
        cw = pw + qw - (mxx - mnx)
        ch = ph + qh - (mxy - mny)
        inter = jnp.maximum(cw, 0.0) * jnp.maximum(ch, 0.0)
        union = pw * ph + qw * qh - inter
        return inter, union

    it, un = _inter_union(pxo, pyo, pwo, pho, gx, gy, gw, gh)
    tconf = jnp.where(un > 0, it / un, 0.0)                      # target_conf

    # silence-mask value at the label cells (same rule the kernel applied)
    it_m, un_m = _inter_union(pxo[:, :, None], pyo[:, :, None],
                              pwo[:, :, None], pho[:, :, None],
                              gx[:, None, :], gy[:, None, :],
                              gw[:, None, :], gh[:, None, :])
    hit = jnp.any((it_m > sil * un_m) & validb[:, None, :], axis=2)
    mask0 = jnp.where(hit, 0.0, noobj)

    # corrections: remove the dense base term, add the true target term
    corr_x = jnp.sum(writer * ((sx_l - tx_t) ** 2 - (sx_l - 0.5) ** 2))
    corr_y = jnp.sum(writer * ((sy_l - ty_t) ** 2 - (sy_l - 0.5) ** 2))
    corr_w = jnp.sum(writer * ((tw_l - tw_t) ** 2 - tw_l ** 2))
    corr_h = jnp.sum(writer * ((th_l - th_t) ** 2 - th_l ** 2))
    corr_c = jnp.sum(writer * (obj_scale * (cf_l - tconf) ** 2
                               - mask0 * cf_l ** 2))

    cls_i = jnp.clip(cls_t.astype(jnp.int32), 0, nc - 1)
    lse = jax.nn.logsumexp(logits_l, axis=-1)
    picked = jnp.take_along_axis(logits_l, cls_i[..., None], axis=-1)[..., 0]
    corr_cls = jnp.sum(writer * (lse - picked))        # masked CE (sum)

    lx = cs * 0.5 * (bx + corr_x)
    ly = cs * 0.5 * (by + corr_y)
    lw = cs * 0.5 * (bw + corr_w)
    lh = cs * 0.5 * (bh + corr_h)
    lconf = 0.5 * (bconf + corr_c)
    lcls = class_scale * corr_cls
    loss = lx + ly + lw + lh + lconf + lcls
    return loss, lx, ly, lw, lh, lconf, lcls


if __name__ == "__main__":
    key = jax.random.PRNGKey(0)
    B, H, W = 2, 16, 16
    nc = int(CFG["classes"])
    na = len(CFG["anchors"].split(",")) // 2
    C = na * (nc + 5)

    k1, _ = jax.random.split(key)
    pred = jax.random.normal(k1, (B, C, H, W), jnp.float32) * 0.5

    # target: (B, 50, [cls, x, y, w, h]); x == 0 terminates the label list
    target = jnp.zeros((B, 50, 5), jnp.float32)
    target = target.at[0, :3].set(
        jnp.array([[1.0, 0.30, 0.40, 0.20, 0.30],
                   [3.0, 0.62, 0.55, 0.10, 0.15],
                   [0.0, 0.80, 0.20, 0.35, 0.40]], jnp.float32))
    target = target.at[1, :2].set(
        jnp.array([[2.0, 0.15, 0.70, 0.25, 0.20],
                   [1.0, 0.55, 0.25, 0.40, 0.50]], jnp.float32))

    out = jax.jit(region_loss)(pred, target)
    out = jax.block_until_ready(out)
    assert all(bool(jnp.isfinite(v)) for v in out)
    print("KERNEL_OK")
</pallas_src>

<mosaic_0001>
module attributes {stable_mosaic.version = 11 : i64} {
  func.func @_region_base_kernel(%arg0: i32, %arg1: i32, %arg2: memref<2xi32, #tpu.memory_space<smem>>, %arg3: memref<2x200xf32, #tpu.memory_space<smem>>, %arg4: memref<2x256xf32, #tpu.memory_space<vmem>>, %arg5: memref<1x5x9x256xf32, #tpu.memory_space<vmem>>, %arg6: memref<1x1x1xf32, #tpu.memory_space<vmem>>, %arg7: memref<1x1x1xf32, #tpu.memory_space<vmem>>, %arg8: memref<1x1x1xf32, #tpu.memory_space<vmem>>, %arg9: memref<1x1x1xf32, #tpu.memory_space<vmem>>, %arg10: memref<1x1x1xf32, #tpu.memory_space<vmem>>, %arg11: memref<64x256xf32, #tpu.memory_space<vmem>>) attributes {dimension_semantics = [#tpu.dimension_semantics<parallel>, #tpu.dimension_semantics<arbitrary>], iteration_bounds = array<i64: 2, 1>, scalar_prefetch = 2 : i64, scratch_operands = 1 : i64, tpu.core_type = #tpu.core_type<tc>, window_params = [{transform_indices = @transform_0, window_bounds = array<i64: 2, 256>}, {transform_indices = @transform_1, window_bounds = array<i64: 1, 5, 9, 256>}, {transform_indices = @transform_2, window_bounds = array<i64: 1, 1, 1>}, {transform_indices = @transform_3, window_bounds = array<i64: 1, 1, 1>}, {transform_indices = @transform_4, window_bounds = array<i64: 1, 1, 1>}, {transform_indices = @transform_5, window_bounds = array<i64: 1, 1, 1>}, {transform_indices = @transform_6, window_bounds = array<i64: 1, 1, 1>}]} {
    %c0_i32 = arith.constant 0 : i32
    %0 = arith.cmpi eq, %arg1, %c0_i32 : i32
    %1 = arith.extui %0 : i1 to i32
    %c0_i32_0 = arith.constant 0 : i32
    %2 = arith.cmpi ne, %1, %c0_i32_0 : i32
    scf.if %2 {
      %cst_204 = arith.constant 0.000000e+00 : f32
      %351 = vector.broadcast %cst_204 : f32 to vector<1x1x1xf32>
      %c0_205 = arith.constant 0 : index
      %c0_206 = arith.constant 0 : index
      %c0_207 = arith.constant 0 : index
      %352 = vector.load %arg6[%c0_205, %c0_206, %c0_207] : memref<1x1x1xf32, #tpu.memory_space<vmem>>, vector<1x1x1xf32>
      tpu.vector_store %arg6[%c0_205, %c0_206, %c0_207], %351 {strides = array<i32>} : memref<1x1x1xf32, #tpu.memory_space<vmem>>, vector<1x1x1xf32>,
      %cst_208 = arith.constant 0.000000e+00 : f32
      %353 = vector.broadcast %cst_208 : f32 to vector<1x1x1xf32>
      %c0_209 = arith.constant 0 : index
      %c0_210 = arith.constant 0 : index
      %c0_211 = arith.constant 0 : index
      %354 = vector.load %arg7[%c0_209, %c0_210, %c0_211] : memref<1x1x1xf32, #tpu.memory_space<vmem>>, vector<1x1x1xf32>
      tpu.vector_store %arg7[%c0_209, %c0_210, %c0_211], %353 {strides = array<i32>} : memref<1x1x1xf32, #tpu.memory_space<vmem>>, vector<1x1x1xf32>,
      %cst_212 = arith.constant 0.000000e+00 : f32
      %355 = vector.broadcast %cst_212 : f32 to vector<1x1x1xf32>
      %c0_213 = arith.constant 0 : index
      %c0_214 = arith.constant 0 : index
      %c0_215 = arith.constant 0 : index
      %356 = vector.load %arg8[%c0_213, %c0_214, %c0_215] : memref<1x1x1xf32, #tpu.memory_space<vmem>>, vector<1x1x1xf32>
      tpu.vector_store %arg8[%c0_213, %c0_214, %c0_215], %355 {strides = array<i32>} : memref<1x1x1xf32, #tpu.memory_space<vmem>>, vector<1x1x1xf32>,
      %cst_216 = arith.constant 0.000000e+00 : f32
      %357 = vector.broadcast %cst_216 : f32 to vector<1x1x1xf32>
      %c0_217 = arith.constant 0 : index
      %c0_218 = arith.constant 0 : index
      %c0_219 = arith.constant 0 : index
      %358 = vector.load %arg9[%c0_217, %c0_218, %c0_219] : memref<1x1x1xf32, #tpu.memory_space<vmem>>, vector<1x1x1xf32>
      tpu.vector_store %arg9[%c0_217, %c0_218, %c0_219], %357 {strides = array<i32>} : memref<1x1x1xf32, #tpu.memory_space<vmem>>, vector<1x1x1xf32>,
      %cst_220 = arith.constant 0.000000e+00 : f32
      %359 = vector.broadcast %cst_220 : f32 to vector<1x1x1xf32>
      %c0_221 = arith.constant 0 : index
      %c0_222 = arith.constant 0 : index
      %c0_223 = arith.constant 0 : index
      %360 = vector.load %arg10[%c0_221, %c0_222, %c0_223] : memref<1x1x1xf32, #tpu.memory_space<vmem>>, vector<1x1x1xf32>
      tpu.vector_store %arg10[%c0_221, %c0_222, %c0_223], %359 {strides = array<i32>} : memref<1x1x1xf32, #tpu.memory_space<vmem>>, vector<1x1x1xf32>,
    } else {
    }
    %c0 = arith.constant 0 : index
    %c0_1 = arith.constant 0 : index
    %3 = vector.load %arg4[%c0, %c0_1] : memref<2x256xf32, #tpu.memory_space<vmem>>, vector<1x256xf32>
    %c1 = arith.constant 1 : index
    %c0_2 = arith.constant 0 : index
    %4 = vector.load %arg4[%c1, %c0_2] : memref<2x256xf32, #tpu.memory_space<vmem>>, vector<1x256xf32>
    %cst = arith.constant 0.000000e+00 : f32
    %5 = vector.broadcast %cst : f32 to vector<1x1xf32>
    %cst_3 = arith.constant 0.000000e+00 : f32
    %6 = vector.broadcast %cst_3 : f32 to vector<1x1xf32>
    %cst_4 = arith.constant 0.000000e+00 : f32
    %7 = vector.broadcast %cst_4 : f32 to vector<1x1xf32>
    %cst_5 = arith.constant 0.000000e+00 : f32
    %8 = vector.broadcast %cst_5 : f32 to vector<1x1xf32>
    %c0_6 = arith.constant 0 : index
    %c0_7 = arith.constant 0 : index
    %c0_8 = arith.constant 0 : index
    %c0_9 = arith.constant 0 : index
    %9 = vector.load %arg5[%c0_6, %c0_7, %c0_8, %c0_9] : memref<1x5x9x256xf32, #tpu.memory_space<vmem>>, vector<1x1x2x256xf32>
    %10 = vector.shape_cast %9 : vector<1x1x2x256xf32> to vector<2x256xf32>
    %c0_10 = arith.constant 0 : index
    %c0_11 = arith.constant 0 : index
    %c2 = arith.constant 2 : index
    %c0_12 = arith.constant 0 : index
    %11 = vector.load %arg5[%c0_10, %c0_11, %c2, %c0_12] : memref<1x5x9x256xf32, #tpu.memory_space<vmem>>, vector<1x1x2x256xf32>
    %12 = vector.shape_cast %11 : vector<1x1x2x256xf32> to vector<2x256xf32>
    %c0_13 = arith.constant 0 : index
    %c0_14 = arith.constant 0 : index
    %c4 = arith.constant 4 : index
    %c0_15 = arith.constant 0 : index
    %13 = vector.load %arg5[%c0_13, %c0_14, %c4, %c0_15] : memref<1x5x9x256xf32, #tpu.memory_space<vmem>>, vector<1x1x1x256xf32>
    %14 = vector.shape_cast %13 : vector<1x1x1x256xf32> to vector<1x256xf32>
    %15 = arith.negf %10 : vector<2x256xf32>
    %16 = math.exp %15 : vector<2x256xf32>
    %cst_16 = arith.constant 1.000000e+00 : f32
    %17 = vector.broadcast %cst_16 : f32 to vector<2x256xf32>
    %18 = arith.addf %17, %16 : vector<2x256xf32>
    %19 = arith.divf %17, %18 : vector<2x256xf32>
    %20 = arith.negf %14 : vector<1x256xf32>
    %21 = math.exp %20 : vector<1x256xf32>
    %cst_17 = arith.constant 1.000000e+00 : f32
    %22 = vector.broadcast %cst_17 : f32 to vector<1x256xf32>
    %23 = arith.addf %22, %21 : vector<1x256xf32>
    %24 = arith.divf %22, %23 : vector<1x256xf32>
    %25 = math.exp %12 : vector<2x256xf32>
    %cst_18 = arith.constant 5.000000e-01 : f32
    %26 = vector.broadcast %cst_18 : f32 to vector<2x256xf32>
    %27 = arith.subf %19, %26 : vector<2x256xf32>
    %28 = arith.mulf %27, %27 : vector<2x256xf32>
    %cst_19 = arith.constant dense<0.000000e+00> : vector<2xf32>
    %29 = vector.multi_reduction <add>, %28, %cst_19 [1] : vector<2x256xf32> to vector<2xf32>
    %30 = vector.shape_cast %29 : vector<2xf32> to vector<2x1xf32>
    %31 = arith.mulf %12, %12 : vector<2x256xf32>
    %cst_20 = arith.constant dense<0.000000e+00> : vector<2xf32>
    %32 = vector.multi_reduction <add>, %31, %cst_20 [1] : vector<2x256xf32> to vector<2xf32>
    %33 = vector.shape_cast %32 : vector<2xf32> to vector<2x1xf32>
    %34 = vector.extract_strided_slice %30 {offsets = [0, 0], sizes = [1, 1], strides = [1, 1]} : vector<2x1xf32> to vector<1x1xf32>
    %35 = arith.addf %5, %34 : vector<1x1xf32>
    %36 = vector.extract_strided_slice %30 {offsets = [1, 0], sizes = [1, 1], strides = [1, 1]} : vector<2x1xf32> to vector<1x1xf32>
    %37 = arith.addf %6, %36 : vector<1x1xf32>
    %38 = vector.extract_strided_slice %33 {offsets = [0, 0], sizes = [1, 1], strides = [1, 1]} : vector<2x1xf32> to vector<1x1xf32>
    %39 = arith.addf %7, %38 : vector<1x1xf32>
    %40 = vector.extract_strided_slice %33 {offsets = [1, 0], sizes = [1, 1], strides = [1, 1]} : vector<2x1xf32> to vector<1x1xf32>
    %41 = arith.addf %8, %40 : vector<1x1xf32>
    %42 = vector.extract_strided_slice %19 {offsets = [0, 0], sizes = [1, 256], strides = [1, 1]} : vector<2x256xf32> to vector<1x256xf32>
    %43 = arith.addf %42, %3 : vector<1x256xf32>
    %44 = vector.extract_strided_slice %19 {offsets = [1, 0], sizes = [1, 256], strides = [1, 1]} : vector<2x256xf32> to vector<1x256xf32>
    %45 = arith.addf %44, %4 : vector<1x256xf32>
    %46 = vector.extract_strided_slice %25 {offsets = [0, 0], sizes = [1, 256], strides = [1, 1]} : vector<2x256xf32> to vector<1x256xf32>
    %cst_21 = arith.constant 1.322100e+00 : f32
    %47 = vector.broadcast %cst_21 : f32 to vector<1x256xf32>
    %48 = arith.mulf %46, %47 : vector<1x256xf32>
    %49 = vector.extract_strided_slice %25 {offsets = [1, 0], sizes = [1, 256], strides = [1, 1]} : vector<2x256xf32> to vector<1x256xf32>
    %cst_22 = arith.constant 1.731450e+00 : f32
    %50 = vector.broadcast %cst_22 : f32 to vector<1x256xf32>
    %51 = arith.mulf %49, %50 : vector<1x256xf32>
    %cst_23 = arith.constant 5.000000e-01 : f32
    %52 = vector.broadcast %cst_23 : f32 to vector<1x256xf32>
    %53 = arith.mulf %48, %52 : vector<1x256xf32>
    %cst_24 = arith.constant 5.000000e-01 : f32
    %54 = vector.broadcast %cst_24 : f32 to vector<1x256xf32>
    %55 = arith.mulf %51, %54 : vector<1x256xf32>
    %56 = arith.subf %43, %53 : vector<1x256xf32>
    %c0_25 = arith.constant 0 : index
    %c0_26 = arith.constant 0 : index
    %57 = vector.load %arg11[%c0_25, %c0_26] : memref<64x256xf32, #tpu.memory_space<vmem>>, vector<1x256xf32>
    tpu.vector_store %arg11[%c0_25, %c0_26], %56 {strides = array<i32>} : memref<64x256xf32, #tpu.memory_space<vmem>>, vector<1x256xf32>,
    %58 = arith.addf %43, %53 : vector<1x256xf32>
    %c8 = arith.constant 8 : index
    %c0_27 = arith.constant 0 : index
    %59 = vector.load %arg11[%c8, %c0_27] : memref<64x256xf32, #tpu.memory_space<vmem>>, vector<1x256xf32>
    tpu.vector_store %arg11[%c8, %c0_27], %58 {strides = array<i32>} : memref<64x256xf32, #tpu.memory_space<vmem>>, vector<1x256xf32>,
    %60 = arith.subf %45, %55 : vector<1x256xf32>
    %c16 = arith.constant 16 : index
    %c0_28 = arith.constant 0 : index
    %61 = vector.load %arg11[%c16, %c0_28] : memref<64x256xf32, #tpu.memory_space<vmem>>, vector<1x256xf32>
    tpu.vector_store %arg11[%c16, %c0_28], %60 {strides = array<i32>} : memref<64x256xf32, #tpu.memory_space<vmem>>, vector<1x256xf32>,
    %62 = arith.addf %45, %55 : vector<1x256xf32>
    %c24 = arith.constant 24 : index
    %c0_29 = arith.constant 0 : index
    %63 = vector.load %arg11[%c24, %c0_29] : memref<64x256xf32, #tpu.memory_space<vmem>>, vector<1x256xf32>
    tpu.vector_store %arg11[%c24, %c0_29], %62 {strides = array<i32>} : memref<64x256xf32, #tpu.memory_space<vmem>>, vector<1x256xf32>,
    %c32 = arith.constant 32 : index
    %c0_30 = arith.constant 0 : index
    %64 = vector.load %arg11[%c32, %c0_30] : memref<64x256xf32, #tpu.memory_space<vmem>>, vector<1x256xf32>
    tpu.vector_store %arg11[%c32, %c0_30], %48 {strides = array<i32>} : memref<64x256xf32, #tpu.memory_space<vmem>>, vector<1x256xf32>,
    %c40 = arith.constant 40 : index
    %c0_31 = arith.constant 0 : index
    %65 = vector.load %arg11[%c40, %c0_31] : memref<64x256xf32, #tpu.memory_space<vmem>>, vector<1x256xf32>
    tpu.vector_store %arg11[%c40, %c0_31], %51 {strides = array<i32>} : memref<64x256xf32, #tpu.memory_space<vmem>>, vector<1x256xf32>,
    %66 = arith.mulf %48, %51 : vector<1x256xf32>
    %c48 = arith.constant 48 : index
    %c0_32 = arith.constant 0 : index
    %67 = vector.load %arg11[%c48, %c0_32] : memref<64x256xf32, #tpu.memory_space<vmem>>, vector<1x256xf32>
    tpu.vector_store %arg11[%c48, %c0_32], %66 {strides = array<i32>} : memref<64x256xf32, #tpu.memory_space<vmem>>, vector<1x256xf32>,
    %c56 = arith.constant 56 : index
    %c0_33 = arith.constant 0 : index
    %68 = vector.load %arg11[%c56, %c0_33] : memref<64x256xf32, #tpu.memory_space<vmem>>, vector<1x256xf32>
    tpu.vector_store %arg11[%c56, %c0_33], %24 {strides = array<i32>} : memref<64x256xf32, #tpu.memory_space<vmem>>, vector<1x256xf32>,
    %c0_34 = arith.constant 0 : index
    %c1_35 = arith.constant 1 : index
    %c0_36 = arith.constant 0 : index
    %c0_37 = arith.constant 0 : index
    %69 = vector.load %arg5[%c0_34, %c1_35, %c0_36, %c0_37] : memref<1x5x9x256xf32, #tpu.memory_space<vmem>>, vector<1x1x2x256xf32>
    %70 = vector.shape_cast %69 : vector<1x1x2x256xf32> to vector<2x256xf32>
    %c0_38 = arith.constant 0 : index
    %c1_39 = arith.constant 1 : index
    %c2_40 = arith.constant 2 : index
    %c0_41 = arith.constant 0 : index
    %71 = vector.load %arg5[%c0_38, %c1_39, %c2_40, %c0_41] : memref<1x5x9x256xf32, #tpu.memory_space<vmem>>, vector<1x1x2x256xf32>
    %72 = vector.shape_cast %71 : vector<1x1x2x256xf32> to vector<2x256xf32>
    %c0_42 = arith.constant 0 : index
    %c1_43 = arith.constant 1 : index
    %c4_44 = arith.constant 4 : index
    %c0_45 = arith.constant 0 : index
    %73 = vector.load %arg5[%c0_42, %c1_43, %c4_44, %c0_45] : memref<1x5x9x256xf32, #tpu.memory_space<vmem>>, vector<1x1x1x256xf32>
    %74 = vector.shape_cast %73 : vector<1x1x1x256xf32> to vector<1x256xf32>
    %75 = arith.negf %70 : vector<2x256xf32>
    %76 = math.exp %75 : vector<2x256xf32>
    %cst_46 = arith.constant 1.000000e+00 : f32
    %77 = vector.broadcast %cst_46 : f32 to vector<2x256xf32>
    %78 = arith.addf %77, %76 : vector<2x256xf32>
    %79 = arith.divf %77, %78 : vector<2x256xf32>
    %80 = arith.negf %74 : vector<1x256xf32>
    %81 = math.exp %80 : vector<1x256xf32>
    %cst_47 = arith.constant 1.000000e+00 : f32
    %82 = vector.broadcast %cst_47 : f32 to vector<1x256xf32>
    %83 = arith.addf %82, %81 : vector<1x256xf32>
    %84 = arith.divf %82, %83 : vector<1x256xf32>
    %85 = math.exp %72 : vector<2x256xf32>
    %cst_48 = arith.constant 5.000000e-01 : f32
    %86 = vector.broadcast %cst_48 : f32 to vector<2x256xf32>
    %87 = arith.subf %79, %86 : vector<2x256xf32>
    %88 = arith.mulf %87, %87 : vector<2x256xf32>
    %cst_49 = arith.constant dense<0.000000e+00> : vector<2xf32>
    %89 = vector.multi_reduction <add>, %88, %cst_49 [1] : vector<2x256xf32> to vector<2xf32>
    %90 = vector.shape_cast %89 : vector<2xf32> to vector<2x1xf32>
    %91 = arith.mulf %72, %72 : vector<2x256xf32>
    %cst_50 = arith.constant dense<0.000000e+00> : vector<2xf32>
    %92 = vector.multi_reduction <add>, %91, %cst_50 [1] : vector<2x256xf32> to vector<2xf32>
    %93 = vector.shape_cast %92 : vector<2xf32> to vector<2x1xf32>
    %94 = vector.extract_strided_slice %90 {offsets = [0, 0], sizes = [1, 1], strides = [1, 1]} : vector<2x1xf32> to vector<1x1xf32>
    %95 = arith.addf %35, %94 : vector<1x1xf32>
    %96 = vector.extract_strided_slice %90 {offsets = [1, 0], sizes = [1, 1], strides = [1, 1]} : vector<2x1xf32> to vector<1x1xf32>
    %97 = arith.addf %37, %96 : vector<1x1xf32>
    %98 = vector.extract_strided_slice %93 {offsets = [0, 0], sizes = [1, 1], strides = [1, 1]} : vector<2x1xf32> to vector<1x1xf32>
    %99 = arith.addf %39, %98 : vector<1x1xf32>
    %100 = vector.extract_strided_slice %93 {offsets = [1, 0], sizes = [1, 1], strides = [1, 1]} : vector<2x1xf32> to vector<1x1xf32>
    %101 = arith.addf %41, %100 : vector<1x1xf32>
    %102 = vector.extract_strided_slice %79 {offsets = [0, 0], sizes = [1, 256], strides = [1, 1]} : vector<2x256xf32> to vector<1x256xf32>
    %103 = arith.addf %102, %3 : vector<1x256xf32>
    %104 = vector.extract_strided_slice %79 {offsets = [1, 0], sizes = [1, 256], strides = [1, 1]} : vector<2x256xf32> to vector<1x256xf32>
    %105 = arith.addf %104, %4 : vector<1x256xf32>
    %106 = vector.extract_strided_slice %85 {offsets = [0, 0], sizes = [1, 256], strides = [1, 1]} : vector<2x256xf32> to vector<1x256xf32>
    %cst_51 = arith.constant 3.192750e+00 : f32
    %107 = vector.broadcast %cst_51 : f32 to vector<1x256xf32>
    %108 = arith.mulf %106, %107 : vector<1x256xf32>
    %109 = vector.extract_strided_slice %85 {offsets = [1, 0], sizes = [1, 256], strides = [1, 1]} : vector<2x256xf32> to vector<1x256xf32>
    %cst_52 = arith.constant 4.009440e+00 : f32
    %110 = vector.broadcast %cst_52 : f32 to vector<1x256xf32>
    %111 = arith.mulf %109, %110 : vector<1x256xf32>
    %cst_53 = arith.constant 5.000000e-01 : f32
    %112 = vector.broadcast %cst_53 : f32 to vector<1x256xf32>
    %113 = arith.mulf %108, %112 : vector<1x256xf32>
    %cst_54 = arith.constant 5.000000e-01 : f32
    %114 = vector.broadcast %cst_54 : f32 to vector<1x256xf32>
    %115 = arith.mulf %111, %114 : vector<1x256xf32>
    %116 = arith.subf %103, %113 : vector<1x256xf32>
    %c1_55 = arith.constant 1 : index
    %c0_56 = arith.constant 0 : index
    %117 = vector.load %arg11[%c1_55, %c0_56] : memref<64x256xf32, #tpu.memory_space<vmem>>, vector<1x256xf32>
    tpu.vector_store %arg11[%c1_55, %c0_56], %116 {strides = array<i32>} : memref<64x256xf32, #tpu.memory_space<vmem>>, vector<1x256xf32>,
    %118 = arith.addf %103, %113 : vector<1x256xf32>
    %c9 = arith.constant 9 : index
    %c0_57 = arith.constant 0 : index
    %119 = vector.load %arg11[%c9, %c0_57] : memref<64x256xf32, #tpu.memory_space<vmem>>, vector<1x256xf32>
    tpu.vector_store %arg11[%c9, %c0_57], %118 {strides = array<i32>} : memref<64x256xf32, #tpu.memory_space<vmem>>, vector<1x256xf32>,
    %120 = arith.subf %105, %115 : vector<1x256xf32>
    %c17 = arith.constant 17 : index
    %c0_58 = arith.constant 0 : index
    %121 = vector.load %arg11[%c17, %c0_58] : memref<64x256xf32, #tpu.memory_space<vmem>>, vector<1x256xf32>
    tpu.vector_store %arg11[%c17, %c0_58], %120 {strides = array<i32>} : memref<64x256xf32, #tpu.memory_space<vmem>>, vector<1x256xf32>,
    %122 = arith.addf %105, %115 : vector<1x256xf32>
    %c25 = arith.constant 25 : index
    %c0_59 = arith.constant 0 : index
    %123 = vector.load %arg11[%c25, %c0_59] : memref<64x256xf32, #tpu.memory_space<vmem>>, vector<1x256xf32>
    tpu.vector_store %arg11[%c25, %c0_59], %122 {strides = array<i32>} : memref<64x256xf32, #tpu.memory_space<vmem>>, vector<1x256xf32>,
    %c33 = arith.constant 33 : index
    %c0_60 = arith.constant 0 : index
    %124 = vector.load %arg11[%c33, %c0_60] : memref<64x256xf32, #tpu.memory_space<vmem>>, vector<1x256xf32>
    tpu.vector_store %arg11[%c33, %c0_60], %108 {strides = array<i32>} : memref<64x256xf32, #tpu.memory_space<vmem>>, vector<1x256xf32>,
    %c41 = arith.constant 41 : index
    %c0_61 = arith.constant 0 : index
    %125 = vector.load %arg11[%c41, %c0_61] : memref<64x256xf32, #tpu.memory_space<vmem>>, vector<1x256xf32>
    tpu.vector_store %arg11[%c41, %c0_61], %111 {strides = array<i32>} : memref<64x256xf32, #tpu.memory_space<vmem>>, vector<1x256xf32>,
    %126 = arith.mulf %108, %111 : vector<1x256xf32>
    %c49 = arith.constant 49 : index
    %c0_62 = arith.constant 0 : index
    %127 = vector.load %arg11[%c49, %c0_62] : memref<64x256xf32, #tpu.memory_space<vmem>>, vector<1x256xf32>
    tpu.vector_store %arg11[%c49, %c0_62], %126 {strides = array<i32>} : memref<64x256xf32, #tpu.memory_space<vmem>>, vector<1x256xf32>,
    %c57 = arith.constant 57 : index
    %c0_63 = arith.constant 0 : index
    %128 = vector.load %arg11[%c57, %c0_63] : memref<64x256xf32, #tpu.memory_space<vmem>>, vector<1x256xf32>
    tpu.vector_store %arg11[%c57, %c0_63], %84 {strides = array<i32>} : memref<64x256xf32, #tpu.memory_space<vmem>>, vector<1x256xf32>,
    %c0_64 = arith.constant 0 : index
    %c2_65 = arith.constant 2 : index
    %c0_66 = arith.constant 0 : index
    %c0_67 = arith.constant 0 : index
    %129 = vector.load %arg5[%c0_64, %c2_65, %c0_66, %c0_67] : memref<1x5x9x256xf32, #tpu.memory_space<vmem>>, vector<1x1x2x256xf32>
    %130 = vector.shape_cast %129 : vector<1x1x2x256xf32> to vector<2x256xf32>
    %c0_68 = arith.constant 0 : index
    %c2_69 = arith.constant 2 : index
    %c2_70 = arith.constant 2 : index
    %c0_71 = arith.constant 0 : index
    %131 = vector.load %arg5[%c0_68, %c2_69, %c2_70, %c0_71] : memref<1x5x9x256xf32, #tpu.memory_space<vmem>>, vector<1x1x2x256xf32>
    %132 = vector.shape_cast %131 : vector<1x1x2x256xf32> to vector<2x256xf32>
    %c0_72 = arith.constant 0 : index
    %c2_73 = arith.constant 2 : index
    %c4_74 = arith.constant 4 : index
    %c0_75 = arith.constant 0 : index
    %133 = vector.load %arg5[%c0_72, %c2_73, %c4_74, %c0_75] : memref<1x5x9x256xf32, #tpu.memory_space<vmem>>, vector<1x1x1x256xf32>
    %134 = vector.shape_cast %133 : vector<1x1x1x256xf32> to vector<1x256xf32>
    %135 = arith.negf %130 : vector<2x256xf32>
    %136 = math.exp %135 : vector<2x256xf32>
    %cst_76 = arith.constant 1.000000e+00 : f32
    %137 = vector.broadcast %cst_76 : f32 to vector<2x256xf32>
    %138 = arith.addf %137, %136 : vector<2x256xf32>
    %139 = arith.divf %137, %138 : vector<2x256xf32>
    %140 = arith.negf %134 : vector<1x256xf32>
    %141 = math.exp %140 : vector<1x256xf32>
    %cst_77 = arith.constant 1.000000e+00 : f32
    %142 = vector.broadcast %cst_77 : f32 to vector<1x256xf32>
    %143 = arith.addf %142, %141 : vector<1x256xf32>
    %144 = arith.divf %142, %143 : vector<1x256xf32>
    %145 = math.exp %132 : vector<2x256xf32>
    %cst_78 = arith.constant 5.000000e-01 : f32
    %146 = vector.broadcast %cst_78 : f32 to vector<2x256xf32>
    %147 = arith.subf %139, %146 : vector<2x256xf32>
    %148 = arith.mulf %147, %147 : vector<2x256xf32>
    %cst_79 = arith.constant dense<0.000000e+00> : vector<2xf32>
    %149 = vector.multi_reduction <add>, %148, %cst_79 [1] : vector<2x256xf32> to vector<2xf32>
    %150 = vector.shape_cast %149 : vector<2xf32> to vector<2x1xf32>
    %151 = arith.mulf %132, %132 : vector<2x256xf32>
    %cst_80 = arith.constant dense<0.000000e+00> : vector<2xf32>
    %152 = vector.multi_reduction <add>, %151, %cst_80 [1] : vector<2x256xf32> to vector<2xf32>
    %153 = vector.shape_cast %152 : vector<2xf32> to vector<2x1xf32>
    %154 = vector.extract_strided_slice %150 {offsets = [0, 0], sizes = [1, 1], strides = [1, 1]} : vector<2x1xf32> to vector<1x1xf32>
    %155 = arith.addf %95, %154 : vector<1x1xf32>
    %156 = vector.extract_strided_slice %150 {offsets = [1, 0], sizes = [1, 1], strides = [1, 1]} : vector<2x1xf32> to vector<1x1xf32>
    %157 = arith.addf %97, %156 : vector<1x1xf32>
    %158 = vector.extract_strided_slice %153 {offsets = [0, 0], sizes = [1, 1], strides = [1, 1]} : vector<2x1xf32> to vector<1x1xf32>
    %159 = arith.addf %99, %158 : vector<1x1xf32>
    %160 = vector.extract_strided_slice %153 {offsets = [1, 0], sizes = [1, 1], strides = [1, 1]} : vector<2x1xf32> to vector<1x1xf32>
    %161 = arith.addf %101, %160 : vector<1x1xf32>
    %162 = vector.extract_strided_slice %139 {offsets = [0, 0], sizes = [1, 256], strides = [1, 1]} : vector<2x256xf32> to vector<1x256xf32>
    %163 = arith.addf %162, %3 : vector<1x256xf32>
    %164 = vector.extract_strided_slice %139 {offsets = [1, 0], sizes = [1, 256], strides = [1, 1]} : vector<2x256xf32> to vector<1x256xf32>
    %165 = arith.addf %164, %4 : vector<1x256xf32>
    %166 = vector.extract_strided_slice %145 {offsets = [0, 0], sizes = [1, 256], strides = [1, 1]} : vector<2x256xf32> to vector<1x256xf32>
    %cst_81 = arith.constant 5.055870e+00 : f32
    %167 = vector.broadcast %cst_81 : f32 to vector<1x256xf32>
    %168 = arith.mulf %166, %167 : vector<1x256xf32>
    %169 = vector.extract_strided_slice %145 {offsets = [1, 0], sizes = [1, 256], strides = [1, 1]} : vector<2x256xf32> to vector<1x256xf32>
    %cst_82 = arith.constant 8.09891986 : f32
    %170 = vector.broadcast %cst_82 : f32 to vector<1x256xf32>
    %171 = arith.mulf %169, %170 : vector<1x256xf32>
    %cst_83 = arith.constant 5.000000e-01 : f32
    %172 = vector.broadcast %cst_83 : f32 to vector<1x256xf32>
    %173 = arith.mulf %168, %172 : vector<1x256xf32>
    %cst_84 = arith.constant 5.000000e-01 : f32
    %174 = vector.broadcast %cst_84 : f32 to vector<1x256xf32>
    %175 = arith.mulf %171, %174 : vector<1x256xf32>
    %176 = arith.subf %163, %173 : vector<1x256xf32>
    %c2_85 = arith.constant 2 : index
    %c0_86 = arith.constant 0 : index
    %177 = vector.load %arg11[%c2_85, %c0_86] : memref<64x256xf32, #tpu.memory_space<vmem>>, vector<1x256xf32>
    tpu.vector_store %arg11[%c2_85, %c0_86], %176 {strides = array<i32>} : memref<64x256xf32, #tpu.memory_space<vmem>>, vector<1x256xf32>,
    %178 = arith.addf %163, %173 : vector<1x256xf32>
    %c10 = arith.constant 10 : index
    %c0_87 = arith.constant 0 : index
    %179 = vector.load %arg11[%c10, %c0_87] : memref<64x256xf32, #tpu.memory_space<vmem>>, vector<1x256xf32>
    tpu.vector_store %arg11[%c10, %c0_87], %178 {strides = array<i32>} : memref<64x256xf32, #tpu.memory_space<vmem>>, vector<1x256xf32>,
    %180 = arith.subf %165, %175 : vector<1x256xf32>
    %c18 = arith.constant 18 : index
    %c0_88 = arith.constant 0 : index
    %181 = vector.load %arg11[%c18, %c0_88] : memref<64x256xf32, #tpu.memory_space<vmem>>, vector<1x256xf32>
    tpu.vector_store %arg11[%c18, %c0_88], %180 {strides = array<i32>} : memref<64x256xf32, #tpu.memory_space<vmem>>, vector<1x256xf32>,
    %182 = arith.addf %165, %175 : vector<1x256xf32>
    %c26 = arith.constant 26 : index
    %c0_89 = arith.constant 0 : index
    %183 = vector.load %arg11[%c26, %c0_89] : memref<64x256xf32, #tpu.memory_space<vmem>>, vector<1x256xf32>
    tpu.vector_store %arg11[%c26, %c0_89], %182 {strides = array<i32>} : memref<64x256xf32, #tpu.memory_space<vmem>>, vector<1x256xf32>,
    %c34 = arith.constant 34 : index
    %c0_90 = arith.constant 0 : index
    %184 = vector.load %arg11[%c34, %c0_90] : memref<64x256xf32, #tpu.memory_space<vmem>>, vector<1x256xf32>
    tpu.vector_store %arg11[%c34, %c0_90], %168 {strides = array<i32>} : memref<64x256xf32, #tpu.memory_space<vmem>>, vector<1x256xf32>,
    %c42 = arith.constant 42 : index
    %c0_91 = arith.constant 0 : index
    %185 = vector.load %arg11[%c42, %c0_91] : memref<64x256xf32, #tpu.memory_space<vmem>>, vector<1x256xf32>
    tpu.vector_store %arg11[%c42, %c0_91], %171 {strides = array<i32>} : memref<64x256xf32, #tpu.memory_space<vmem>>, vector<1x256xf32>,
    %186 = arith.mulf %168, %171 : vector<1x256xf32>
    %c50 = arith.constant 50 : index
    %c0_92 = arith.constant 0 : index
    %187 = vector.load %arg11[%c50, %c0_92] : memref<64x256xf32, #tpu.memory_space<vmem>>, vector<1x256xf32>
    tpu.vector_store %arg11[%c50, %c0_92], %186 {strides = array<i32>} : memref<64x256xf32, #tpu.memory_space<vmem>>, vector<1x256xf32>,
    %c58 = arith.constant 58 : index
    %c0_93 = arith.constant 0 : index
    %188 = vector.load %arg11[%c58, %c0_93] : memref<64x256xf32, #tpu.memory_space<vmem>>, vector<1x256xf32>
    tpu.vector_store %arg11[%c58, %c0_93], %144 {strides = array<i32>} : memref<64x256xf32, #tpu.memory_space<vmem>>, vector<1x256xf32>,
    %c0_94 = arith.constant 0 : index
    %c3 = arith.constant 3 : index
    %c0_95 = arith.constant 0 : index
    %c0_96 = arith.constant 0 : index
    %189 = vector.load %arg5[%c0_94, %c3, %c0_95, %c0_96] : memref<1x5x9x256xf32, #tpu.memory_space<vmem>>, vector<1x1x2x256xf32>
    %190 = vector.shape_cast %189 : vector<1x1x2x256xf32> to vector<2x256xf32>
    %c0_97 = arith.constant 0 : index
    %c3_98 = arith.constant 3 : index
    %c2_99 = arith.constant 2 : index
    %c0_100 = arith.constant 0 : index
    %191 = vector.load %arg5[%c0_97, %c3_98, %c2_99, %c0_100] : memref<1x5x9x256xf32, #tpu.memory_space<vmem>>, vector<1x1x2x256xf32>
    %192 = vector.shape_cast %191 : vector<1x1x2x256xf32> to vector<2x256xf32>
    %c0_101 = arith.constant 0 : index
    %c3_102 = arith.constant 3 : index
    %c4_103 = arith.constant 4 : index
    %c0_104 = arith.constant 0 : index
    %193 = vector.load %arg5[%c0_101, %c3_102, %c4_103, %c0_104] : memref<1x5x9x256xf32, #tpu.memory_space<vmem>>, vector<1x1x1x256xf32>
    %194 = vector.shape_cast %193 : vector<1x1x1x256xf32> to vector<1x256xf32>
    %195 = arith.negf %190 : vector<2x256xf32>
    %196 = math.exp %195 : vector<2x256xf32>
    %cst_105 = arith.constant 1.000000e+00 : f32
    %197 = vector.broadcast %cst_105 : f32 to vector<2x256xf32>
    %198 = arith.addf %197, %196 : vector<2x256xf32>
    %199 = arith.divf %197, %198 : vector<2x256xf32>
    %200 = arith.negf %194 : vector<1x256xf32>
    %201 = math.exp %200 : vector<1x256xf32>
    %cst_106 = arith.constant 1.000000e+00 : f32
    %202 = vector.broadcast %cst_106 : f32 to vector<1x256xf32>
    %203 = arith.addf %202, %201 : vector<1x256xf32>
    %204 = arith.divf %202, %203 : vector<1x256xf32>
    %205 = math.exp %192 : vector<2x256xf32>
    %cst_107 = arith.constant 5.000000e-01 : f32
    %206 = vector.broadcast %cst_107 : f32 to vector<2x256xf32>
    %207 = arith.subf %199, %206 : vector<2x256xf32>
    %208 = arith.mulf %207, %207 : vector<2x256xf32>
    %cst_108 = arith.constant dense<0.000000e+00> : vector<2xf32>
    %209 = vector.multi_reduction <add>, %208, %cst_108 [1] : vector<2x256xf32> to vector<2xf32>
    %210 = vector.shape_cast %209 : vector<2xf32> to vector<2x1xf32>
    %211 = arith.mulf %192, %192 : vector<2x256xf32>
    %cst_109 = arith.constant dense<0.000000e+00> : vector<2xf32>
    %212 = vector.multi_reduction <add>, %211, %cst_109 [1] : vector<2x256xf32> to vector<2xf32>
    %213 = vector.shape_cast %212 : vector<2xf32> to vector<2x1xf32>
    %214 = vector.extract_strided_slice %210 {offsets = [0, 0], sizes = [1, 1], strides = [1, 1]} : vector<2x1xf32> to vector<1x1xf32>
    %215 = arith.addf %155, %214 : vector<1x1xf32>
    %216 = vector.extract_strided_slice %210 {offsets = [1, 0], sizes = [1, 1], strides = [1, 1]} : vector<2x1xf32> to vector<1x1xf32>
    %217 = arith.addf %157, %216 : vector<1x1xf32>
    %218 = vector.extract_strided_slice %213 {offsets = [0, 0], sizes = [1, 1], strides = [1, 1]} : vector<2x1xf32> to vector<1x1xf32>
    %219 = arith.addf %159, %218 : vector<1x1xf32>
    %220 = vector.extract_strided_slice %213 {offsets = [1, 0], sizes = [1, 1], strides = [1, 1]} : vector<2x1xf32> to vector<1x1xf32>
    %221 = arith.addf %161, %220 : vector<1x1xf32>
    %222 = vector.extract_strided_slice %199 {offsets = [0, 0], sizes = [1, 256], strides = [1, 1]} : vector<2x256xf32> to vector<1x256xf32>
    %223 = arith.addf %222, %3 : vector<1x256xf32>
    %224 = vector.extract_strided_slice %199 {offsets = [1, 0], sizes = [1, 256], strides = [1, 1]} : vector<2x256xf32> to vector<1x256xf32>
    %225 = arith.addf %224, %4 : vector<1x256xf32>
    %226 = vector.extract_strided_slice %205 {offsets = [0, 0], sizes = [1, 256], strides = [1, 1]} : vector<2x256xf32> to vector<1x256xf32>
    %cst_110 = arith.constant 9.47111988 : f32
    %227 = vector.broadcast %cst_110 : f32 to vector<1x256xf32>
    %228 = arith.mulf %226, %227 : vector<1x256xf32>
    %229 = vector.extract_strided_slice %205 {offsets = [1, 0], sizes = [1, 256], strides = [1, 1]} : vector<2x256xf32> to vector<1x256xf32>
    %cst_111 = arith.constant 4.840530e+00 : f32
    %230 = vector.broadcast %cst_111 : f32 to vector<1x256xf32>
    %231 = arith.mulf %229, %230 : vector<1x256xf32>
    %cst_112 = arith.constant 5.000000e-01 : f32
    %232 = vector.broadcast %cst_112 : f32 to vector<1x256xf32>
    %233 = arith.mulf %228, %232 : vector<1x256xf32>
    %cst_113 = arith.constant 5.000000e-01 : f32
    %234 = vector.broadcast %cst_113 : f32 to vector<1x256xf32>
    %235 = arith.mulf %231, %234 : vector<1x256xf32>
    %236 = arith.subf %223, %233 : vector<1x256xf32>
    %c3_114 = arith.constant 3 : index
    %c0_115 = arith.constant 0 : index
    %237 = vector.load %arg11[%c3_114, %c0_115] : memref<64x256xf32, #tpu.memory_space<vmem>>, vector<1x256xf32>
    tpu.vector_store %arg11[%c3_114, %c0_115], %236 {strides = array<i32>} : memref<64x256xf32, #tpu.memory_space<vmem>>, vector<1x256xf32>,
    %238 = arith.addf %223, %233 : vector<1x256xf32>
    %c11 = arith.constant 11 : index
    %c0_116 = arith.constant 0 : index
    %239 = vector.load %arg11[%c11, %c0_116] : memref<64x256xf32, #tpu.memory_space<vmem>>, vector<1x256xf32>
    tpu.vector_store %arg11[%c11, %c0_116], %238 {strides = array<i32>} : memref<64x256xf32, #tpu.memory_space<vmem>>, vector<1x256xf32>,
    %240 = arith.subf %225, %235 : vector<1x256xf32>
    %c19 = arith.constant 19 : index
    %c0_117 = arith.constant 0 : index
    %241 = vector.load %arg11[%c19, %c0_117] : memref<64x256xf32, #tpu.memory_space<vmem>>, vector<1x256xf32>
    tpu.vector_store %arg11[%c19, %c0_117], %240 {strides = array<i32>} : memref<64x256xf32, #tpu.memory_space<vmem>>, vector<1x256xf32>,
    %242 = arith.addf %225, %235 : vector<1x256xf32>
    %c27 = arith.constant 27 : index
    %c0_118 = arith.constant 0 : index
    %243 = vector.load %arg11[%c27, %c0_118] : memref<64x256xf32, #tpu.memory_space<vmem>>, vector<1x256xf32>
    tpu.vector_store %arg11[%c27, %c0_118], %242 {strides = array<i32>} : memref<64x256xf32, #tpu.memory_space<vmem>>, vector<1x256xf32>,
    %c35 = arith.constant 35 : index
    %c0_119 = arith.constant 0 : index
    %244 = vector.load %arg11[%c35, %c0_119] : memref<64x256xf32, #tpu.memory_space<vmem>>, vector<1x256xf32>
    tpu.vector_store %arg11[%c35, %c0_119], %228 {strides = array<i32>} : memref<64x256xf32, #tpu.memory_space<vmem>>, vector<1x256xf32>,
    %c43 = arith.constant 43 : index
    %c0_120 = arith.constant 0 : index
    %245 = vector.load %arg11[%c43, %c0_120] : memref<64x256xf32, #tpu.memory_space<vmem>>, vector<1x256xf32>
    tpu.vector_store %arg11[%c43, %c0_120], %231 {strides = array<i32>} : memref<64x256xf32, #tpu.memory_space<vmem>>, vector<1x256xf32>,
    %246 = arith.mulf %228, %231 : vector<1x256xf32>
    %c51 = arith.constant 51 : index
    %c0_121 = arith.constant 0 : index
    %247 = vector.load %arg11[%c51, %c0_121] : memref<64x256xf32, #tpu.memory_space<vmem>>, vector<1x256xf32>
    tpu.vector_store %arg11[%c51, %c0_121], %246 {strides = array<i32>} : memref<64x256xf32, #tpu.memory_space<vmem>>, vector<1x256xf32>,
    %c59 = arith.constant 59 : index
    %c0_122 = arith.constant 0 : index
    %248 = vector.load %arg11[%c59, %c0_122] : memref<64x256xf32, #tpu.memory_space<vmem>>, vector<1x256xf32>
    tpu.vector_store %arg11[%c59, %c0_122], %204 {strides = array<i32>} : memref<64x256xf32, #tpu.memory_space<vmem>>, vector<1x256xf32>,
    %c0_123 = arith.constant 0 : index
    %c4_124 = arith.constant 4 : index
    %c0_125 = arith.constant 0 : index
    %c0_126 = arith.constant 0 : index
    %249 = vector.load %arg5[%c0_123, %c4_124, %c0_125, %c0_126] : memref<1x5x9x256xf32, #tpu.memory_space<vmem>>, vector<1x1x2x256xf32>
    %250 = vector.shape_cast %249 : vector<1x1x2x256xf32> to vector<2x256xf32>
    %c0_127 = arith.constant 0 : index
    %c4_128 = arith.constant 4 : index
    %c2_129 = arith.constant 2 : index
    %c0_130 = arith.constant 0 : index
    %251 = vector.load %arg5[%c0_127, %c4_128, %c2_129, %c0_130] : memref<1x5x9x256xf32, #tpu.memory_space<vmem>>, vector<1x1x2x256xf32>
    %252 = vector.shape_cast %251 : vector<1x1x2x256xf32> to vector<2x256xf32>
    %c0_131 = arith.constant 0 : index
    %c4_132 = arith.constant 4 : index
    %c4_133 = arith.constant 4 : index
    %c0_134 = arith.constant 0 : index
    %253 = vector.load %arg5[%c0_131, %c4_132, %c4_133, %c0_134] : memref<1x5x9x256xf32, #tpu.memory_space<vmem>>, vector<1x1x1x256xf32>
    %254 = vector.shape_cast %253 : vector<1x1x1x256xf32> to vector<1x256xf32>
    %255 = arith.negf %250 : vector<2x256xf32>
    %256 = math.exp %255 : vector<2x256xf32>
    %cst_135 = arith.constant 1.000000e+00 : f32
    %257 = vector.broadcast %cst_135 : f32 to vector<2x256xf32>
    %258 = arith.addf %257, %256 : vector<2x256xf32>
    %259 = arith.divf %257, %258 : vector<2x256xf32>
    %260 = arith.negf %254 : vector<1x256xf32>
    %261 = math.exp %260 : vector<1x256xf32>
    %cst_136 = arith.constant 1.000000e+00 : f32
    %262 = vector.broadcast %cst_136 : f32 to vector<1x256xf32>
    %263 = arith.addf %262, %261 : vector<1x256xf32>
    %264 = arith.divf %262, %263 : vector<1x256xf32>
    %265 = math.exp %252 : vector<2x256xf32>
    %cst_137 = arith.constant 5.000000e-01 : f32
    %266 = vector.broadcast %cst_137 : f32 to vector<2x256xf32>
    %267 = arith.subf %259, %266 : vector<2x256xf32>
    %268 = arith.mulf %267, %267 : vector<2x256xf32>
    %cst_138 = arith.constant dense<0.000000e+00> : vector<2xf32>
    %269 = vector.multi_reduction <add>, %268, %cst_138 [1] : vector<2x256xf32> to vector<2xf32>
    %270 = vector.shape_cast %269 : vector<2xf32> to vector<2x1xf32>
    %271 = arith.mulf %252, %252 : vector<2x256xf32>
    %cst_139 = arith.constant dense<0.000000e+00> : vector<2xf32>
    %272 = vector.multi_reduction <add>, %271, %cst_139 [1] : vector<2x256xf32> to vector<2xf32>
    %273 = vector.shape_cast %272 : vector<2xf32> to vector<2x1xf32>
    %274 = vector.extract_strided_slice %270 {offsets = [0, 0], sizes = [1, 1], strides = [1, 1]} : vector<2x1xf32> to vector<1x1xf32>
    %275 = arith.addf %215, %274 : vector<1x1xf32>
    %276 = vector.extract_strided_slice %270 {offsets = [1, 0], sizes = [1, 1], strides = [1, 1]} : vector<2x1xf32> to vector<1x1xf32>
    %277 = arith.addf %217, %276 : vector<1x1xf32>
    %278 = vector.extract_strided_slice %273 {offsets = [0, 0], sizes = [1, 1], strides = [1, 1]} : vector<2x1xf32> to vector<1x1xf32>
    %279 = arith.addf %219, %278 : vector<1x1xf32>
    %280 = vector.extract_strided_slice %273 {offsets = [1, 0], sizes = [1, 1], strides = [1, 1]} : vector<2x1xf32> to vector<1x1xf32>
    %281 = arith.addf %221, %280 : vector<1x1xf32>
    %282 = vector.extract_strided_slice %259 {offsets = [0, 0], sizes = [1, 256], strides = [1, 1]} : vector<2x256xf32> to vector<1x256xf32>
    %283 = arith.addf %282, %3 : vector<1x256xf32>
    %284 = vector.extract_strided_slice %259 {offsets = [1, 0], sizes = [1, 256], strides = [1, 1]} : vector<2x256xf32> to vector<1x256xf32>
    %285 = arith.addf %284, %4 : vector<1x256xf32>
    %286 = vector.extract_strided_slice %265 {offsets = [0, 0], sizes = [1, 256], strides = [1, 1]} : vector<2x256xf32> to vector<1x256xf32>
    %cst_140 = arith.constant 1.123640e+01 : f32
    %287 = vector.broadcast %cst_140 : f32 to vector<1x256xf32>
    %288 = arith.mulf %286, %287 : vector<1x256xf32>
    %289 = vector.extract_strided_slice %265 {offsets = [1, 0], sizes = [1, 256], strides = [1, 1]} : vector<2x256xf32> to vector<1x256xf32>
    %cst_141 = arith.constant 1.000710e+01 : f32
    %290 = vector.broadcast %cst_141 : f32 to vector<1x256xf32>
    %291 = arith.mulf %289, %290 : vector<1x256xf32>
    %cst_142 = arith.constant 5.000000e-01 : f32
    %292 = vector.broadcast %cst_142 : f32 to vector<1x256xf32>
    %293 = arith.mulf %288, %292 : vector<1x256xf32>
    %cst_143 = arith.constant 5.000000e-01 : f32
    %294 = vector.broadcast %cst_143 : f32 to vector<1x256xf32>
    %295 = arith.mulf %291, %294 : vector<1x256xf32>
    %296 = arith.subf %283, %293 : vector<1x256xf32>
    %c4_144 = arith.constant 4 : index
    %c0_145 = arith.constant 0 : index
    %297 = vector.load %arg11[%c4_144, %c0_145] : memref<64x256xf32, #tpu.memory_space<vmem>>, vector<1x256xf32>
    tpu.vector_store %arg11[%c4_144, %c0_145], %296 {strides = array<i32>} : memref<64x256xf32, #tpu.memory_space<vmem>>, vector<1x256xf32>,
    %298 = arith.addf %283, %293 : vector<1x256xf32>
    %c12 = arith.constant 12 : index
    %c0_146 = arith.constant 0 : index
    %299 = vector.load %arg11[%c12, %c0_146] : memref<64x256xf32, #tpu.memory_space<vmem>>, vector<1x256xf32>
    tpu.vector_store %arg11[%c12, %c0_146], %298 {strides = array<i32>} : memref<64x256xf32, #tpu.memory_space<vmem>>, vector<1x256xf32>,
    %300 = arith.subf %285, %295 : vector<1x256xf32>
    %c20 = arith.constant 20 : index
    %c0_147 = arith.constant 0 : index
    %301 = vector.load %arg11[%c20, %c0_147] : memref<64x256xf32, #tpu.memory_space<vmem>>, vector<1x256xf32>
    tpu.vector_store %arg11[%c20, %c0_147], %300 {strides = array<i32>} : memref<64x256xf32, #tpu.memory_space<vmem>>, vector<1x256xf32>,
    %302 = arith.addf %285, %295 : vector<1x256xf32>
    %c28 = arith.constant 28 : index
    %c0_148 = arith.constant 0 : index
    %303 = vector.load %arg11[%c28, %c0_148] : memref<64x256xf32, #tpu.memory_space<vmem>>, vector<1x256xf32>
    tpu.vector_store %arg11[%c28, %c0_148], %302 {strides = array<i32>} : memref<64x256xf32, #tpu.memory_space<vmem>>, vector<1x256xf32>,
    %c36 = arith.constant 36 : index
    %c0_149 = arith.constant 0 : index
    %304 = vector.load %arg11[%c36, %c0_149] : memref<64x256xf32, #tpu.memory_space<vmem>>, vector<1x256xf32>
    tpu.vector_store %arg11[%c36, %c0_149], %288 {strides = array<i32>} : memref<64x256xf32, #tpu.memory_space<vmem>>, vector<1x256xf32>,
    %c44 = arith.constant 44 : index
    %c0_150 = arith.constant 0 : index
    %305 = vector.load %arg11[%c44, %c0_150] : memref<64x256xf32, #tpu.memory_space<vmem>>, vector<1x256xf32>
    tpu.vector_store %arg11[%c44, %c0_150], %291 {strides = array<i32>} : memref<64x256xf32, #tpu.memory_space<vmem>>, vector<1x256xf32>,
    %306 = arith.mulf %288, %291 : vector<1x256xf32>
    %c52 = arith.constant 52 : index
    %c0_151 = arith.constant 0 : index
    %307 = vector.load %arg11[%c52, %c0_151] : memref<64x256xf32, #tpu.memory_space<vmem>>, vector<1x256xf32>
    tpu.vector_store %arg11[%c52, %c0_151], %306 {strides = array<i32>} : memref<64x256xf32, #tpu.memory_space<vmem>>, vector<1x256xf32>,
    %c60 = arith.constant 60 : index
    %c0_152 = arith.constant 0 : index
    %308 = vector.load %arg11[%c60, %c0_152] : memref<64x256xf32, #tpu.memory_space<vmem>>, vector<1x256xf32>
    tpu.vector_store %arg11[%c60, %c0_152], %264 {strides = array<i32>} : memref<64x256xf32, #tpu.memory_space<vmem>>, vector<1x256xf32>,
    %c0_153 = arith.constant 0 : index
    %c0_154 = arith.constant 0 : index
    %309 = vector.load %arg11[%c0_153, %c0_154] : memref<64x256xf32, #tpu.memory_space<vmem>>, vector<5x256xf32>
    %c8_155 = arith.constant 8 : index
    %c0_156 = arith.constant 0 : index
    %310 = vector.load %arg11[%c8_155, %c0_156] : memref<64x256xf32, #tpu.memory_space<vmem>>, vector<5x256xf32>
    %c16_157 = arith.constant 16 : index
    %c0_158 = arith.constant 0 : index
    %311 = vector.load %arg11[%c16_157, %c0_158] : memref<64x256xf32, #tpu.memory_space<vmem>>, vector<5x256xf32>
    %c24_159 = arith.constant 24 : index
    %c0_160 = arith.constant 0 : index
    %312 = vector.load %arg11[%c24_159, %c0_160] : memref<64x256xf32, #tpu.memory_space<vmem>>, vector<5x256xf32>
    %c32_161 = arith.constant 32 : index
    %c0_162 = arith.constant 0 : index
    %313 = vector.load %arg11[%c32_161, %c0_162] : memref<64x256xf32, #tpu.memory_space<vmem>>, vector<5x256xf32>
    %c40_163 = arith.constant 40 : index
    %c0_164 = arith.constant 0 : index
    %314 = vector.load %arg11[%c40_163, %c0_164] : memref<64x256xf32, #tpu.memory_space<vmem>>, vector<5x256xf32>
    %c48_165 = arith.constant 48 : index
    %c0_166 = arith.constant 0 : index
    %315 = vector.load %arg11[%c48_165, %c0_166] : memref<64x256xf32, #tpu.memory_space<vmem>>, vector<5x256xf32>
    %c56_167 = arith.constant 56 : index
    %c0_168 = arith.constant 0 : index
    %316 = vector.load %arg11[%c56_167, %c0_168] : memref<64x256xf32, #tpu.memory_space<vmem>>, vector<5x256xf32>
    %317 = arith.index_cast %arg0 : i32 to index
    %318 = memref.load %arg2[%317] : memref<2xi32, #tpu.memory_space<smem>>
    %cst_169 = arith.constant 1.000000e+00 : f32
    %319 = vector.broadcast %cst_169 : f32 to vector<5x256xf32>
    %c0_i32_170 = arith.constant 0 : i32
    %320 = arith.subi %318, %c0_i32_170 : i32
    %321 = arith.addi %c0_i32_170, %320 : i32
    %c1_i32 = arith.constant 1 : i32
    %322 = scf.for %arg12 = %c0_i32_170 to %321 step %c1_i32 iter_args(%arg13 = %319) -> (vector<5x256xf32>)  : i32 {
      %351 = arith.index_cast %arg0 : i32 to index
      %352 = arith.index_cast %arg12 : i32 to index
      %353 = memref.load %arg3[%351, %352] : memref<2x200xf32, #tpu.memory_space<smem>>
      %c50_i32 = arith.constant 50 : i32
      %354 = arith.addi %c50_i32, %arg12 : i32
      %355 = arith.index_cast %arg0 : i32 to index
      %356 = arith.index_cast %354 : i32 to index
      %357 = memref.load %arg3[%355, %356] : memref<2x200xf32, #tpu.memory_space<smem>>
      %c100_i32 = arith.constant 100 : i32
      %358 = arith.addi %c100_i32, %arg12 : i32
      %359 = arith.index_cast %arg0 : i32 to index
      %360 = arith.index_cast %358 : i32 to index
      %361 = memref.load %arg3[%359, %360] : memref<2x200xf32, #tpu.memory_space<smem>>
      %c150_i32 = arith.constant 150 : i32
      %362 = arith.addi %c150_i32, %arg12 : i32
      %363 = arith.index_cast %arg0 : i32 to index
      %364 = arith.index_cast %362 : i32 to index
      %365 = memref.load %arg3[%363, %364] : memref<2x200xf32, #tpu.memory_space<smem>>
      %cst_204 = arith.constant 5.000000e-01 : f32
      %366 = arith.mulf %361, %cst_204 : f32
      %cst_205 = arith.constant 5.000000e-01 : f32
      %367 = arith.mulf %365, %cst_205 : f32
      %368 = arith.subf %353, %366 : f32
      %369 = vector.broadcast %368 : f32 to vector<5x256xf32>
      %370 = arith.minimumf %309, %369 : vector<5x256xf32>
      %371 = arith.addf %353, %366 : f32
      %372 = vector.broadcast %371 : f32 to vector<5x256xf32>
      %373 = arith.maximumf %310, %372 : vector<5x256xf32>
      %374 = arith.subf %357, %367 : f32
      %375 = vector.broadcast %374 : f32 to vector<5x256xf32>
      %376 = arith.minimumf %311, %375 : vector<5x256xf32>
      %377 = arith.addf %357, %367 : f32
      %378 = vector.broadcast %377 : f32 to vector<5x256xf32>
      %379 = arith.maximumf %312, %378 : vector<5x256xf32>
      %380 = vector.broadcast %361 : f32 to vector<5x256xf32>
      %381 = arith.addf %313, %380 : vector<5x256xf32>
      %382 = arith.subf %373, %370 : vector<5x256xf32>
      %383 = arith.subf %381, %382 : vector<5x256xf32>
      %384 = vector.broadcast %365 : f32 to vector<5x256xf32>
      %385 = arith.addf %314, %384 : vector<5x256xf32>
      %386 = arith.subf %379, %376 : vector<5x256xf32>
      %387 = arith.subf %385, %386 : vector<5x256xf32>
      %cst_206 = arith.constant 0.000000e+00 : f32
      %388 = vector.broadcast %cst_206 : f32 to vector<5x256xf32>
      %389 = arith.maximumf %383, %388 : vector<5x256xf32>
      %cst_207 = arith.constant 0.000000e+00 : f32
      %390 = vector.broadcast %cst_207 : f32 to vector<5x256xf32>
      %391 = arith.maximumf %387, %390 : vector<5x256xf32>
      %392 = arith.mulf %389, %391 : vector<5x256xf32>
      %393 = arith.mulf %361, %365 : f32
      %394 = vector.broadcast %393 : f32 to vector<5x256xf32>
      %395 = arith.addf %315, %394 : vector<5x256xf32>
      %396 = arith.subf %395, %392 : vector<5x256xf32>
      %cst_208 = arith.constant 6.000000e-01 : f32
      %397 = vector.broadcast %cst_208 : f32 to vector<5x256xf32>
      %398 = arith.mulf %397, %396 : vector<5x256xf32>
      %399 = arith.cmpf ogt, %392, %398 : vector<5x256xf32>
      %cst_209 = arith.constant 0.000000e+00 : f32
      %400 = vector.broadcast %cst_209 : f32 to vector<5x256xf32>
      %401 = arith.select %399, %400, %arg13 : vector<5x256xi1>, vector<5x256xf32>
      scf.yield %401 : vector<5x256xf32>
    }
    %323 = arith.mulf %322, %316 : vector<5x256xf32>
    %324 = arith.mulf %323, %316 : vector<5x256xf32>
    %cst_171 = arith.constant dense<0.000000e+00> : vector<5xf32>
    %325 = vector.multi_reduction <add>, %324, %cst_171 [1] : vector<5x256xf32> to vector<5xf32>
    %326 = vector.shape_cast %325 : vector<5xf32> to vector<5x1xf32>
    %cst_172 = arith.constant dense<0.000000e+00> : vector<1xf32>
    %327 = vector.multi_reduction <add>, %326, %cst_172 [0] : vector<5x1xf32> to vector<1xf32>
    %328 = vector.shape_cast %327 : vector<1xf32> to vector<1x1xf32>
    %cst_173 = arith.constant 1.000000e+00 : f32
    %329 = vector.broadcast %cst_173 : f32 to vector<1x1xf32>
    %330 = arith.mulf %329, %328 : vector<1x1xf32>
    %c0_174 = arith.constant 0 : index
    %c0_175 = arith.constant 0 : index
    %c0_176 = arith.constant 0 : index
    %331 = vector.load %arg6[%c0_174, %c0_175, %c0_176] : memref<1x1x1xf32, #tpu.memory_space<vmem>>, vector<1x1x1xf32>
    %332 = vector.shape_cast %275 : vector<1x1xf32> to vector<1x1x1xf32>
    %333 = arith.addf %331, %332 : vector<1x1x1xf32>
    %c0_177 = arith.constant 0 : index
    %c0_178 = arith.constant 0 : index
    %c0_179 = arith.constant 0 : index
    %334 = vector.load %arg6[%c0_177, %c0_178, %c0_179] : memref<1x1x1xf32, #tpu.memory_space<vmem>>, vector<1x1x1xf32>
    tpu.vector_store %arg6[%c0_177, %c0_178, %c0_179], %333 {strides = array<i32>} : memref<1x1x1xf32, #tpu.memory_space<vmem>>, vector<1x1x1xf32>,
    %c0_180 = arith.constant 0 : index
    %c0_181 = arith.constant 0 : index
    %c0_182 = arith.constant 0 : index
    %335 = vector.load %arg7[%c0_180, %c0_181, %c0_182] : memref<1x1x1xf32, #tpu.memory_space<vmem>>, vector<1x1x1xf32>
    %336 = vector.shape_cast %277 : vector<1x1xf32> to vector<1x1x1xf32>
    %337 = arith.addf %335, %336 : vector<1x1x1xf32>
    %c0_183 = arith.constant 0 : index
    %c0_184 = arith.constant 0 : index
    %c0_185 = arith.constant 0 : index
    %338 = vector.load %arg7[%c0_183, %c0_184, %c0_185] : memref<1x1x1xf32, #tpu.memory_space<vmem>>, vector<1x1x1xf32>
    tpu.vector_store %arg7[%c0_183, %c0_184, %c0_185], %337 {strides = array<i32>} : memref<1x1x1xf32, #tpu.memory_space<vmem>>, vector<1x1x1xf32>,
    %c0_186 = arith.constant 0 : index
    %c0_187 = arith.constant 0 : index
    %c0_188 = arith.constant 0 : index
    %339 = vector.load %arg8[%c0_186, %c0_187, %c0_188] : memref<1x1x1xf32, #tpu.memory_space<vmem>>, vector<1x1x1xf32>
    %340 = vector.shape_cast %279 : vector<1x1xf32> to vector<1x1x1xf32>
    %341 = arith.addf %339, %340 : vector<1x1x1xf32>
    %c0_189 = arith.constant 0 : index
    %c0_190 = arith.constant 0 : index
    %c0_191 = arith.constant 0 : index
    %342 = vector.load %arg8[%c0_189, %c0_190, %c0_191] : memref<1x1x1xf32, #tpu.memory_space<vmem>>, vector<1x1x1xf32>
    tpu.vector_store %arg8[%c0_189, %c0_190, %c0_191], %341 {strides = array<i32>} : memref<1x1x1xf32, #tpu.memory_space<vmem>>, vector<1x1x1xf32>,
    %c0_192 = arith.constant 0 : index
    %c0_193 = arith.constant 0 : index
    %c0_194 = arith.constant 0 : index
    %343 = vector.load %arg9[%c0_192, %c0_193, %c0_194] : memref<1x1x1xf32, #tpu.memory_space<vmem>>, vector<1x1x1xf32>
    %344 = vector.shape_cast %281 : vector<1x1xf32> to vector<1x1x1xf32>
    %345 = arith.addf %343, %344 : vector<1x1x1xf32>
    %c0_195 = arith.constant 0 : index
    %c0_196 = arith.constant 0 : index
    %c0_197 = arith.constant 0 : index
    %346 = vector.load %arg9[%c0_195, %c0_196, %c0_197] : memref<1x1x1xf32, #tpu.memory_space<vmem>>, vector<1x1x1xf32>
    tpu.vector_store %arg9[%c0_195, %c0_196, %c0_197], %345 {strides = array<i32>} : memref<1x1x1xf32, #tpu.memory_space<vmem>>, vector<1x1x1xf32>,
    %c0_198 = arith.constant 0 : index
    %c0_199 = arith.constant 0 : index
    %c0_200 = arith.constant 0 : index
    %347 = vector.load %arg10[%c0_198, %c0_199, %c0_200] : memref<1x1x1xf32, #tpu.memory_space<vmem>>, vector<1x1x1xf32>
    %348 = vector.shape_cast %330 : vector<1x1xf32> to vector<1x1x1xf32>
    %349 = arith.addf %347, %348 : vector<1x1x1xf32>
    %c0_201 = arith.constant 0 : index
    %c0_202 = arith.constant 0 : index
    %c0_203 = arith.constant 0 : index
    %350 = vector.load %arg10[%c0_201, %c0_202, %c0_203] : memref<1x1x1xf32, #tpu.memory_space<vmem>>, vector<1x1x1xf32>
    tpu.vector_store %arg10[%c0_201, %c0_202, %c0_203], %349 {strides = array<i32>} : memref<1x1x1xf32, #tpu.memory_space<vmem>>, vector<1x1x1xf32>,
    return
  }
  func.func @transform_0(%arg0: i32, %arg1: i32, %arg2: memref<2xi32, #tpu.memory_space<smem>>, %arg3: memref<2x200xf32, #tpu.memory_space<smem>>) -> (i32, i32) {
    %c0_i32 = arith.constant 0 : i32
    %c0_i32_0 = arith.constant 0 : i32
    return %c0_i32, %arg1 : i32, i32
  }
  func.func @transform_1(%arg0: i32, %arg1: i32, %arg2: memref<2xi32, #tpu.memory_space<smem>>, %arg3: memref<2x200xf32, #tpu.memory_space<smem>>) -> (i32, i32, i32, i32) {
    %c0_i32 = arith.constant 0 : i32
    %c0_i32_0 = arith.constant 0 : i32
    %c0_i32_1 = arith.constant 0 : i32
    return %arg0, %c0_i32, %c0_i32_0, %arg1 : i32, i32, i32, i32
  }
  func.func @transform_2(%arg0: i32, %arg1: i32, %arg2: memref<2xi32, #tpu.memory_space<smem>>, %arg3: memref<2x200xf32, #tpu.memory_space<smem>>) -> (i32, i32, i32) {
    %c0_i32 = arith.constant 0 : i32
    %c0_i32_0 = arith.constant 0 : i32
    %c0_i32_1 = arith.constant 0 : i32
    return %arg0, %c0_i32, %c0_i32_0 : i32, i32, i32
  }
  func.func @transform_3(%arg0: i32, %arg1: i32, %arg2: memref<2xi32, #tpu.memory_space<smem>>, %arg3: memref<2x200xf32, #tpu.memory_space<smem>>) -> (i32, i32, i32) {
    %c0_i32 = arith.constant 0 : i32
    %c0_i32_0 = arith.constant 0 : i32
    %c0_i32_1 = arith.constant 0 : i32
    return %arg0, %c0_i32, %c0_i32_0 : i32, i32, i32
  }
  func.func @transform_4(%arg0: i32, %arg1: i32, %arg2: memref<2xi32, #tpu.memory_space<smem>>, %arg3: memref<2x200xf32, #tpu.memory_space<smem>>) -> (i32, i32, i32) {
    %c0_i32 = arith.constant 0 : i32
    %c0_i32_0 = arith.constant 0 : i32
    %c0_i32_1 = arith.constant 0 : i32
    return %arg0, %c0_i32, %c0_i32_0 : i32, i32, i32
  }
  func.func @transform_5(%arg0: i32, %arg1: i32, %arg2: memref<2xi32, #tpu.memory_space<smem>>, %arg3: memref<2x200xf32, #tpu.memory_space<smem>>) -> (i32, i32, i32) {
    %c0_i32 = arith.constant 0 : i32
    %c0_i32_0 = arith.constant 0 : i32
    %c0_i32_1 = arith.constant 0 : i32
    return %arg0, %c0_i32, %c0_i32_0 : i32, i32, i32
  }
  func.func @transform_6(%arg0: i32, %arg1: i32, %arg2: memref<2xi32, #tpu.memory_space<smem>>, %arg3: memref<2x200xf32, #tpu.memory_space<smem>>) -> (i32, i32, i32) {
    %c0_i32 = arith.constant 0 : i32
    %c0_i32_0 = arith.constant 0 : i32
    %c0_i32_1 = arith.constant 0 : i32
    return %arg0, %c0_i32, %c0_i32_0 : i32, i32, i32
  }
}

</mosaic_0001>

<llo_original>
// kernel: region_loss.1
$region0: #{region_loss.1}
  #allocation0 [shape = 'u32[]', space=smem, size = 0x4, offset = 0x4, fixed_abs, tag = 'smem constant byte address 0x4 - core index']
  #allocation1 [shape = 'u32[144,128]{1,0:T(1,128)}', space=vmem, size = 0x12000, scoped, tag = 'internal scratch']
  #allocation2 [shape = 'f32[64,256]{1,0:T(8,128)}', space=vmem, size = 0x10000, scoped, tag = 'scratch operand']
  #allocation3 [shape = 's32[1]{0}', space=sflag, size = 0x4, scoped, tag = 'scoped memory for region_loss.1']
  #allocation4 [shape = 'u8[512]{0}', space=smem, size = 0x200, scoped, tag = 'prefetched SMEM operand 0']
  #allocation5 [shape = 'u8[2048]{0}', space=smem, size = 0x800, scoped, tag = 'prefetched SMEM operand 1']
  %s0 = inlined_call_operand.vmem [shape: s32[2], index: 0, kind: input, shape index: {}]
  %s1 = inlined_call_operand.vmem [shape: f32[2,200], index: 1, kind: input, shape index: {}]
  %s2 = inlined_call_operand.vmem [shape: f32[2,256], index: 2, kind: input, shape index: {}]
  %s3 = inlined_call_operand.vmem [shape: f32[2,5,9,256], index: 3, kind: input, shape index: {}]
  %s4 = inlined_call_operand.vmem [shape: f32[2,1,1], index: 4, kind: output, shape index: {0}]
  %s5 = inlined_call_operand.vmem [shape: f32[2,1,1], index: 5, kind: output, shape index: {1}]
  %s6 = inlined_call_operand.vmem [shape: f32[2,1,1], index: 6, kind: output, shape index: {2}]
  %s7 = inlined_call_operand.vmem [shape: f32[2,1,1], index: 7, kind: output, shape index: {3}]
  %s8 = inlined_call_operand.vmem [shape: f32[2,1,1], index: 8, kind: output, shape index: {4}]
  %9 = xla_tuple %s4, %s5, %s6, %s7, %s8
  %s10 = sld [smem:[#allocation0]]
  $region84: #{region_loss.1} parent=0
    _
  %s12 = ssub.s32 1, %s10
  %s13 = scalar_select 0, %s12, %s10
  %s14 = sshll.u32 %s0, 4
  %s15 = int_to_ptr.vmem [resolvable:$true] %s14
  %17 = dma.vmem_to_smem %s15, 16, [#allocation4], [#allocation3]
  %s18 = sshll.u32 %s1, 4
  %s19 = int_to_ptr.vmem [resolvable:$true] %s18
  %21 = dma.vmem_to_smem %s19, 64, [#allocation5], [#allocation3]
  %22 = dma.done [#allocation3], 80
  %23 = sfence
  loop: start=0, step=1, limit=4
  $region2: #{region_loss.1} parent=0 // loop_pre_header
    _
  $region3: #{region_loss.1} parent=0 // loop_header
    %s25 = sphi 0, %s29
    %p26 = scmp.ge.s32.totalorder %s25, 4
    %s32 = sphi 0, %s44
    %s33 = sphi 0, %s40
    %s34 = sphi 0, %s32
    %s35 = sphi 0, %s33
    %s36 = sphi 0, %s34
    %s37 = sphi 0, %s35
    %s47 = sphi 0, %s49
    %s50 = sphi 0, %s47
    %s51 = sphi 0, %s50
    %s67 = sphi 0, %s51
    %s75 = sphi 0, %s77
    %s78 = sphi 0, %s75
    %s79 = sphi 0, %s78
    %s95 = sphi 0, %s79
    %s101 = sphi 0, %s103
    %s104 = sphi 0, %s101
    %s105 = sphi 0, %s104
    %s121 = sphi 0, %s105
    %s127 = sphi 0, %s129
    %s130 = sphi 0, %s127
    %s131 = sphi 0, %s130
    %s147 = sphi 0, %s131
    %s153 = sphi 0, %s155
    %s156 = sphi 0, %s153
    %s157 = sphi 0, %s156
    %s173 = sphi 0, %s157
    %s179 = sphi 0, %s181
    %s182 = sphi 0, %s179
    %s183 = sphi 0, %s182
    %s199 = sphi 0, %s183
    %s205 = sphi 0, %s207
    %s208 = sphi 0, %s205
    %s209 = sphi 0, %s208
    %s225 = sphi 0, %s209
  $region4: #{region_loss.1} parent=0 // loop_header_branch
    %28 = sbr.rel (%p26) target = $region8
  $region5: #{region_loss.1} parent=0 // loop_body
    %s30 = ssub.s32 %s25, 1
    %s31 = ssub.s32 %s25, 2
    %s38 = sadd.s32 1, %s33
    %p39 = scmp.ge.s32.totalorder %s38, 1
    %s40 = scalar_select %p39, 0, %s38
    %s41 = sadd.s32 1, %s32
    %s42 = scalar_select %p39, %s41, %s32
    %p43 = scmp.ge.s32.totalorder %s42, 2
    %s44 = scalar_select %p43, 0, %s42
    %s45 = ssub.s32 %s33, %s40
    %p46 = scmp.eq.s32.totalorder %s45, 0
    %s48 = sadd.s32 %s47, 1
    %s49 = scalar_select %p46, %s47, %s48
    %p52 = pneg %p46
    %p53 = scmp.eq.s32.totalorder %s25, 1
    %p54 = por %p52, %p53
    %p55 = scmp.ne.s32.totalorder %s47, %s50
    %p56 = scmp.eq.s32.totalorder %s25, 0
    %p57 = por %p55, %p56
    %p58 = scmp.ne.s32.totalorder %s47, %s50
    %p59 = scmp.eq.s32.totalorder %s30, 1
    %p60 = por %p58, %p59
    %p61 = scmp.ne.s32.totalorder %s50, %s51
    %p62 = scmp.eq.s32.totalorder %s30, 0
    %p63 = por %p61, %p62
    %p64 = scmp.ne.s32.totalorder %s50, %s51
    %p65 = scmp.eq.s32.totalorder %s31, 1
    %p66 = por %p64, %p65
    %p68 = scmp.ne.s32.totalorder %s51, %s67
    %p69 = scmp.eq.s32.totalorder %s31, 0
    %p70 = por %p68, %p69
    %s71 = ssub.s32 %s32, %s44
    %s72 = ssub.s32 %s33, %s40
    %s73 = sor.u32 %s71, %s72
    %p74 = scmp.eq.s32.totalorder %s73, 0
    %s76 = sadd.s32 %s75, 1
    %s77 = scalar_select %p74, %s75, %s76
    %p80 = pneg %p74
    %p81 = scmp.eq.s32.totalorder %s25, 1
    %p82 = por %p80, %p81
    %p83 = scmp.ne.s32.totalorder %s75, %s78
    %p84 = scmp.eq.s32.totalorder %s25, 0
    %p85 = por %p83, %p84
    %p86 = scmp.ne.s32.totalorder %s75, %s78
    %p87 = scmp.eq.s32.totalorder %s30, 1
    %p88 = por %p86, %p87
    %p89 = scmp.ne.s32.totalorder %s78, %s79
    %p90 = scmp.eq.s32.totalorder %s30, 0
    %p91 = por %p89, %p90
    %p92 = scmp.ne.s32.totalorder %s78, %s79
    %p93 = scmp.eq.s32.totalorder %s31, 1
    %p94 = por %p92, %p93
    %p96 = scmp.ne.s32.totalorder %s79, %s95
    %p97 = scmp.eq.s32.totalorder %s31, 0
    %p98 = por %p96, %p97
    %s99 = ssub.s32 %s32, %s44
    %p100 = scmp.eq.s32.totalorder %s99, 0
    %s102 = sadd.s32 %s101, 1
    %s103 = scalar_select %p100, %s101, %s102
    %p106 = pneg %p100
    %p107 = scmp.eq.s32.totalorder %s25, 1
    %p108 = por %p106, %p107
    %p109 = scmp.ne.s32.totalorder %s101, %s104
    %p110 = scmp.eq.s32.totalorder %s25, 0
    %p111 = por %p109, %p110
    %p112 = scmp.ne.s32.totalorder %s101, %s104
    %p113 = scmp.eq.s32.totalorder %s30, 1
    %p114 = por %p112, %p113
    %p115 = scmp.ne.s32.totalorder %s104, %s105
    %p116 = scmp.eq.s32.totalorder %s30, 0
    %p117 = por %p115, %p116
    %p118 = scmp.ne.s32.totalorder %s104, %s105
    %p119 = scmp.eq.s32.totalorder %s31, 1
    %p120 = por %p118, %p119
    %p122 = scmp.ne.s32.totalorder %s105, %s121
    %p123 = scmp.eq.s32.totalorder %s31, 0
    %p124 = por %p122, %p123
    %s125 = ssub.s32 %s32, %s44
    %p126 = scmp.eq.s32.totalorder %s125, 0
    %s128 = sadd.s32 %s127, 1
    %s129 = scalar_select %p126, %s127, %s128
    %p132 = pneg %p126
    %p133 = scmp.eq.s32.totalorder %s25, 1
    %p134 = por %p132, %p133
    %p135 = scmp.ne.s32.totalorder %s127, %s130
    %p136 = scmp.eq.s32.totalorder %s25, 0
    %p137 = por %p135, %p136
    %p138 = scmp.ne.s32.totalorder %s127, %s130
    %p139 = scmp.eq.s32.totalorder %s30, 1
    %p140 = por %p138, %p139
    %p141 = scmp.ne.s32.totalorder %s130, %s131
    %p142 = scmp.eq.s32.totalorder %s30, 0
    %p143 = por %p141, %p142
    %p144 = scmp.ne.s32.totalorder %s130, %s131
    %p145 = scmp.eq.s32.totalorder %s31, 1
    %p146 = por %p144, %p145
    %p148 = scmp.ne.s32.totalorder %s131, %s147
    %p149 = scmp.eq.s32.totalorder %s31, 0
    %p150 = por %p148, %p149
    %s151 = ssub.s32 %s32, %s44
    %p152 = scmp.eq.s32.totalorder %s151, 0
    %s154 = sadd.s32 %s153, 1
    %s155 = scalar_select %p152, %s153, %s154
    %p158 = pneg %p152
    %p159 = scmp.eq.s32.totalorder %s25, 1
    %p160 = por %p158, %p159
    %p161 = scmp.ne.s32.totalorder %s153, %s156
    %p162 = scmp.eq.s32.totalorder %s25, 0
    %p163 = por %p161, %p162
    %p164 = scmp.ne.s32.totalorder %s153, %s156
    %p165 = scmp.eq.s32.totalorder %s30, 1
    %p166 = por %p164, %p165
    %p167 = scmp.ne.s32.totalorder %s156, %s157
    %p168 = scmp.eq.s32.totalorder %s30, 0
    %p169 = por %p167, %p168
    %p170 = scmp.ne.s32.totalorder %s156, %s157
    %p171 = scmp.eq.s32.totalorder %s31, 1
    %p172 = por %p170, %p171
    %p174 = scmp.ne.s32.totalorder %s157, %s173
    %p175 = scmp.eq.s32.totalorder %s31, 0
    %p176 = por %p174, %p175
    %s177 = ssub.s32 %s32, %s44
    %p178 = scmp.eq.s32.totalorder %s177, 0
    %s180 = sadd.s32 %s179, 1
    %s181 = scalar_select %p178, %s179, %s180
    %p184 = pneg %p178
    %p185 = scmp.eq.s32.totalorder %s25, 1
    %p186 = por %p184, %p185
    %p187 = scmp.ne.s32.totalorder %s179, %s182
    %p188 = scmp.eq.s32.totalorder %s25, 0
    %p189 = por %p187, %p188
    %p190 = scmp.ne.s32.totalorder %s179, %s182
    %p191 = scmp.eq.s32.totalorder %s30, 1
    %p192 = por %p190, %p191
    %p193 = scmp.ne.s32.totalorder %s182, %s183
    %p194 = scmp.eq.s32.totalorder %s30, 0
    %p195 = por %p193, %p194
    %p196 = scmp.ne.s32.totalorder %s182, %s183
    %p197 = scmp.eq.s32.totalorder %s31, 1
    %p198 = por %p196, %p197
    %p200 = scmp.ne.s32.totalorder %s183, %s199
    %p201 = scmp.eq.s32.totalorder %s31, 0
    %p202 = por %p200, %p201
    %s203 = ssub.s32 %s32, %s44
    %p204 = scmp.eq.s32.totalorder %s203, 0
    %s206 = sadd.s32 %s205, 1
    %s207 = scalar_select %p204, %s205, %s206
    %p210 = pneg %p204
    %p211 = scmp.eq.s32.totalorder %s25, 1
    %p212 = por %p210, %p211
    %p213 = scmp.ne.s32.totalorder %s205, %s208
    %p214 = scmp.eq.s32.totalorder %s25, 0
    %p215 = por %p213, %p214
    %p216 = scmp.ne.s32.totalorder %s205, %s208
    %p217 = scmp.eq.s32.totalorder %s30, 1
    %p218 = por %p216, %p217
    %p219 = scmp.ne.s32.totalorder %s208, %s209
    %p220 = scmp.eq.s32.totalorder %s30, 0
    %p221 = por %p219, %p220
    %p222 = scmp.ne.s32.totalorder %s208, %s209
    %p223 = scmp.eq.s32.totalorder %s31, 1
    %p224 = por %p222, %p223
    %p226 = scmp.ne.s32.totalorder %s209, %s225
    %p227 = scmp.eq.s32.totalorder %s31, 0
    %p228 = por %p226, %p227
    %p229 = scmp.le.s32.totalorder 1, %s25
    %p230 = scmp.lt.s32.totalorder %s25, 3
    %p231 = pnand %p229, %p230
    %p232 = pneg %p231
    // Predicated region
    $region9: #{region_loss.1} parent=5 // pred_check
      _
    $region10: #{region_loss.1} parent=5 // pred_check_branch
      %234 = sbr.rel (%p231) target = $region12
    $region11: #{region_loss.1} parent=5 // pred_region
      %s235 = ssub.s32 %s25, 1
      // Predicated region
      $region13: #{region_loss.1} parent=11 // pred_check
        %p236 = pneg %p63
      $region14: #{region_loss.1} parent=11 // pred_check_branch
        %238 = sbr.rel (%p236) target = $region16
      $region15: #{region_loss.1} parent=11 // pred_region
        %s239 = smul.u32 2, %s35
        %p240 = scmp.lt.s32.totalorder %s239, 1
        %s241 = scalar_select %p240, %s239, 1
        %s242 = smul.addr %s241, 2
        %s243 = scalar_lea.vmem %s2, %s242
        %s244 = smul.u32 2, %s35
      $region16: #{region_loss.1} parent=11 // pred_fallthru
        _
    $region12: #{region_loss.1} parent=5 // pred_fallthru
      _
    %p245 = scmp.lt.s32.totalorder %s25, 2
    // Predicated region
    $region17: #{region_loss.1} parent=5 // pred_check
      %p246 = pneg %p245
    $region18: #{region_loss.1} parent=5 // pred_check_branch
      %248 = sbr.rel (%p246) target = $region20
    $region19: #{region_loss.1} parent=5 // pred_region
      // Predicated region
      $region21: #{region_loss.1} parent=19 // pred_check
        %p249 = pneg %p85
      $region22: #{region_loss.1} parent=19 // pred_check_branch
        %251 = sbr.rel (%p249) target = $region24
      $region23: #{region_loss.1} parent=19 // pred_region
        %s252 = smul.u32 2, %s33
        %p253 = scmp.lt.s32.totalorder %s32, 1
        %s254 = scalar_select %p253, %s32, 1
        %p255 = scmp.lt.s32.totalorder %s252, 1
        %s256 = scalar_select %p255, %s252, 1
        %s257 = smul.addr %s254, 20
        %s258 = sadd.s32 %s256, %s257
        %s259 = smul.addr %s258, 8
        %s260 = scalar_lea.vmem %s3, %s259
        %s261 = smul.u32 2, %s33
      $region24: #{region_loss.1} parent=19 // pred_fallthru
        _
    $region20: #{region_loss.1} parent=5 // pred_fallthru
      _
    %p262 = scmp.le.s32.totalorder 1, %s25
    %p263 = scmp.lt.s32.totalorder %s25, 3
    %p264 = pnand %p262, %p263
    %p265 = pneg %p264
    // Predicated region
    $region25: #{region_loss.1} parent=5 // pred_check
      _
    $region26: #{region_loss.1} parent=5 // pred_check_branch
      %267 = sbr.rel (%p264) target = $region28
    $region27: #{region_loss.1} parent=5 // pred_region
      %s268 = ssub.s32 %s25, 1
      %s269 = smul.u32 2, %s35
      %p270 = scmp.lt.s32.totalorder %s269, 1
      %s271 = scalar_select %p270, %s269, 1
      %s272 = smul.addr %s271, 2
      %s273 = scalar_lea.vmem %s2, %s272
      %p274 = pneg %p63
      %p275 = pneg %p60
      %s276 = smul.u32 2, %s35
      %p277 = scmp.lt.s32.totalorder %s34, 1
      %s278 = scalar_select %p277, %s34, 1
      %p279 = scmp.lt.s32.totalorder %s276, 1
      %s280 = scalar_select %p279, %s276, 1
      %s281 = smul.addr %s278, 20
      %s282 = sadd.s32 %s280, %s281
      %s283 = smul.addr %s282, 8
      %s284 = scalar_lea.vmem %s3, %s283
      %p285 = pneg %p91
      %p286 = pneg %p88
      %p287 = pneg %p117
      %p288 = pneg %p114
      %p289 = scmp.lt.s32.totalorder %s34, 1
      %s290 = scalar_select %p289, %s34, 1
      %s291 = scalar_lea.vmem %s4, %s290
      %p292 = pneg %p143
      %p293 = pneg %p140
      %p294 = scmp.lt.s32.totalorder %s34, 1
      %s295 = scalar_select %p294, %s34, 1
      %s296 = scalar_lea.vmem %s5, %s295
      %p297 = pneg %p169
      %p298 = pneg %p166
      %p299 = scmp.lt.s32.totalorder %s34, 1
      %s300 = scalar_select %p299, %s34, 1
      %s301 = scalar_lea.vmem %s6, %s300
      %p302 = pneg %p195
      %p303 = pneg %p192
      %p304 = scmp.lt.s32.totalorder %s34, 1
      %s305 = scalar_select %p304, %s34, 1
      %s306 = scalar_lea.vmem %s7, %s305
      %p307 = pneg %p221
      %p308 = pneg %p218
      %p309 = scmp.lt.s32.totalorder %s34, 1
      %s310 = scalar_select %p309, %s34, 1
      %s311 = scalar_lea.vmem %s8, %s310
      %s312 = smul.u32 2, %s35
      %p313 = scmp.lt.s32.totalorder %s312, 1
      %s314 = scalar_select %p313, %s312, 1
      %s315 = smul.addr %s314, 2
      %s316 = scalar_lea.vmem %s2, %s315
      %s317 = smul.u32 2, %s35
      %s318 = smul.u32 2, %s35
      %p319 = scmp.lt.s32.totalorder %s34, 1
      %s320 = scalar_select %p319, %s34, 1
      %p321 = scmp.lt.s32.totalorder %s318, 1
      %s322 = scalar_select %p321, %s318, 1
      %s323 = smul.addr %s320, 20
      %s324 = sadd.s32 %s322, %s323
      %s325 = smul.addr %s324, 8
      %s326 = scalar_lea.vmem %s3, %s325
      %s327 = smul.u32 2, %s35
      %p328 = scmp.lt.s32.totalorder %s34, 1
      %s329 = scalar_select %p328, %s34, 1
      %s330 = scalar_lea.vmem %s4, %s329
      %p331 = scmp.lt.s32.totalorder %s34, 1
      %s332 = scalar_select %p331, %s34, 1
      %s333 = scalar_lea.vmem %s5, %s332
      %p334 = scmp.lt.s32.totalorder %s34, 1
      %s335 = scalar_select %p334, %s34, 1
      %s336 = scalar_lea.vmem %s6, %s335
      %p337 = scmp.lt.s32.totalorder %s34, 1
      %s338 = scalar_select %p337, %s34, 1
      %s339 = scalar_lea.vmem %s7, %s338
      %p340 = scmp.lt.s32.totalorder %s34, 1
      %s341 = scalar_select %p340, %s34, 1
      %s342 = scalar_lea.vmem %s8, %s341
      %p343 = scmp.eq.s32.totalorder %s35, 0
      // Predicated region
      $region29: #{region_loss.1} parent=27 // pred_check
        %p344 = pneg %p343
      $region30: #{region_loss.1} parent=27 // pred_check_branch
        %346 = sbr.rel (%p344) target = $region32
      $region31: #{region_loss.1} parent=27 // pred_region
        %vm347 = vcmask 0
        %348 = vst.msk [vmem:[%s330] sm:$0x1] %vm347, 0.0
        %349 = vst.msk [vmem:[%s333] sm:$0x1] %vm347, 0.0
        %350 = vst.msk [vmem:[%s336] sm:$0x1] %vm347, 0.0
        %351 = vst.msk [vmem:[%s339] sm:$0x1] %vm347, 0.0
        %352 = vst.msk [vmem:[%s342] sm:$0x1] %vm347, 0.0
      $region32: #{region_loss.1} parent=27 // pred_fallthru
        _
      %v353 = vld [vmem:[%s316] ss:$2 sm:$0x3]
      %s354 = scalar_lea.vmem %s316, 1
      %v355 = vld [vmem:[%s354] ss:$2 sm:$0x3]
      %v356 = vld [vmem:[%s326] sm:$0x3]
      %v357 = vld [vmem:[%s326 + $0x8] sm:$0x3]
      %v358 = vld [vmem:[%s326] sm:$0xc]
      %v359 = vld [vmem:[%s326 + $0x8] sm:$0xc]
      %s360 = scalar_lea.vmem %s326, 4
      %v361 = vld [vmem:[%s360] ss:$8 sm:$0x3]
      %v362 = vxor.u32 %v356, 2147483648
      %v363 = vxor.u32 %v357, 2147483648
      %v364 = vmul.f32 %v362, 1.442695
      %v365 = vpow.pop %v364
      %v366 = vmul.f32 %v363, 1.442695
      %v367 = vpow.pop %v366
      %v368 = vadd.f32 %v365, 1.0
      %v369 = vadd.f32 %v367, 1.0
      %v370 = vrcp.pop %v368
      %v371 = vmul.f32 1.0, %v370
      %v372 = vrcp.pop %v369
      %v373 = vmul.f32 1.0, %v372
      %v374 = vxor.u32 %v361, 2147483648
      %v375 = vmul.f32 %v374, 1.442695
      %v376 = vpow.pop %v375
      %v377 = vadd.f32 %v376, 1.0
      %v378 = vrcp.pop %v377
      %v379 = vmul.f32 1.0, %v378
      %v380 = vmul.f32 %v358, 1.442695
      %v381 = vpow.pop %v380
      %v382 = vmul.f32 %v359, 1.442695
      %v383 = vpow.pop %v382
      %v384 = vsub.f32 %v371, 0.5
      %v385 = vsub.f32 %v373, 0.5
      %v386 = vmul.f32 %v384, %v384
      %v387 = vmul.f32 %v385, %v385
      %vm388 = vcmask 1041408
      %v389 = vsel %vm388, %v386, 0.0
      %v390 = vsel %vm388, %v387, 0.0
      %v391 = vadd.f32 %v389, %v390
      %392 = vadd.xlane.f32.xlu0 %v391
      %v393 = vpop.xlane.xlu0 %392
      %v394 = vmul.f32 %v358, %v358
      %v395 = vmul.f32 %v359, %v359
      %vm396 = vcmask 1043458
      %v397 = vsel %vm396, %v394, 0.0
      %v398 = vsel %vm396, %v395, 0.0
      %v399 = vadd.f32 %v397, %v398
      %400 = vadd.xlane.f32.xlu0 %v399
      %v401 = vpop.xlane.xlu0 %400
      %v402 = vadd.f32 %v393, 0.0
      %v403 = vadd.f32 %v401, 0.0
      %v405 = vlaneseq
      %v406 = vshrl.u32 %v405, 7
      %v407 = vsub.s32 0, %v406
      %v408 = vrot.slane %v353, %v407
      %v409 = vlaneseq
      %v410 = vshrl.u32 %v409, 7
      %v411 = vsub.s32 1, %v410
      %v412 = vrot.slane %v353, %v411
      %v415 = vadd.f32 %v371, %v408
      %v416 = vadd.f32 %v373, %v412
      %v418 = vlaneseq
      %v419 = vshrl.u32 %v418, 7
      %v420 = vsub.s32 0, %v419
      %v421 = vrot.slane %v355, %v420
      %v422 = vlaneseq
      %v423 = vshrl.u32 %v422, 7
      %v424 = vsub.s32 1, %v423
      %v425 = vrot.slane %v355, %v424
      %v428 = vadd.f32 %v371, %v421
      %v429 = vadd.f32 %v373, %v425
      %v430 = vmul.f32 %v381, 1.3221
      %v431 = vmul.f32 %v383, 1.3221
      %v432 = vmul.f32 %v381, 1.73145
      %v433 = vmul.f32 %v383, 1.73145
      %v434 = vmul.f32 %v430, 0.5
      %v435 = vmul.f32 %v431, 0.5
      %v436 = vmul.f32 %v432, 0.5
      %v437 = vmul.f32 %v433, 0.5
      %v440 = vrot.slane %v434, 2
      %v441 = vrot.slane %v435, 2
      %v444 = vsub.f32 %v415, %v440
      %v445 = vsub.f32 %v416, %v441
      %v448 = vcombine.low %v444, %v445
      %v450 = vunpack.c.l.s4 1966171168
      %v451 = vunpack.c.0.s8 %v450
      %v452 = vlaneseq
      %v453 = vshrl.u32 %v452, 7
      %v454 = vsub.s32 %v451, %v453
      %v455 = vrot.slane %v448, %v454
      %v457 = vunpack.c.l.s4 1966171168
      %v458 = vunpack.c.0.s8 %v457
      %v459 = vlaneseq
      %v460 = vshrl.u32 %v459, 7
      %v461 = vsub.s32 %v458, %v460
      %v462 = vrot.slane %v455, %v461
      %v464 = vlaneseq
      %vm465 = vcmp.ge.s32.totalorder %v464, 0
      %vm466 = vcmp.lt.s32.totalorder %v464, 256
      %vm467 = vmand %vm465, %vm466
      %468 = vst.msk [vmem:[#allocation2] ss:$8 sm:$0x3] %vm467, %v462
      %469 = vst.msk [vmem:[#allocation2] ss:$8 sm:$0x0] %vm467, %v462
      %v470 = vadd.f32 %v415, %v440
      %v471 = vadd.f32 %v416, %v441
      %v474 = vcombine.low %v470, %v471
      %v476 = vunpack.c.l.s4 1966171168
      %v477 = vunpack.c.0.s8 %v476
      %v478 = vlaneseq
      %v479 = vshrl.u32 %v478, 7
      %v480 = vsub.s32 %v477, %v479
      %v481 = vrot.slane %v474, %v480
      %v483 = vunpack.c.l.s4 1966171168
      %v484 = vunpack.c.0.s8 %v483
      %v485 = vlaneseq
      %v486 = vshrl.u32 %v485, 7
      %v487 = vsub.s32 %v484, %v486
      %v488 = vrot.slane %v481, %v487
      %s490 = scalar_lea.vmem [#allocation2], 16
      %491 = vst.msk [vmem:[%s490] ss:$8 sm:$0x3] %vm467, %v488
      %492 = vst.msk [vmem:[%s490] ss:$8 sm:$0x0] %vm467, %v488
      %v495 = vrot.slane %v436, 2
      %v496 = vrot.slane %v437, 2
      %v499 = vsub.f32 %v428, %v495
      %v500 = vsub.f32 %v429, %v496
      %v503 = vcombine.low %v499, %v500
      %v505 = vunpack.c.l.s4 1966171168
      %v506 = vunpack.c.0.s8 %v505
      %v507 = vlaneseq
      %v508 = vshrl.u32 %v507, 7
      %v509 = vsub.s32 %v506, %v508
      %v510 = vrot.slane %v503, %v509
      %v511 = vcombine.high %v510, %v510
      %v513 = vunpack.c.l.s4 1966171168
      %v514 = vunpack.c.0.s8 %v513
      %v515 = vlaneseq
      %v516 = vshrl.u32 %v515, 7
      %v517 = vsub.s32 %v514, %v516
      %v518 = vrot.slane %v511, %v517
      %s520 = scalar_lea.vmem [#allocation2], 32
      %521 = vst.msk [vmem:[%s520] ss:$8 sm:$0x3] %vm467, %v518
      %522 = vst.msk [vmem:[%s520] ss:$8 sm:$0x0] %vm467, %v518
      %v523 = vadd.f32 %v428, %v495
      %v524 = vadd.f32 %v429, %v496
      %v527 = vcombine.low %v523, %v524
      %v529 = vunpack.c.l.s4 1966171168
      %v530 = vunpack.c.0.s8 %v529
      %v531 = vlaneseq
      %v532 = vshrl.u32 %v531, 7
      %v533 = vsub.s32 %v530, %v532
      %v534 = vrot.slane %v527, %v533
      %v535 = vcombine.high %v534, %v534
      %v537 = vunpack.c.l.s4 1966171168
      %v538 = vunpack.c.0.s8 %v537
      %v539 = vlaneseq
      %v540 = vshrl.u32 %v539, 7
      %v541 = vsub.s32 %v538, %v540
      %v542 = vrot.slane %v535, %v541
      %s544 = scalar_lea.vmem [#allocation2], 48
      %545 = vst.msk [vmem:[%s544] ss:$8 sm:$0x3] %vm467, %v542
      %546 = vst.msk [vmem:[%s544] ss:$8 sm:$0x0] %vm467, %v542
      %v549 = vcombine.low %v430, %v431
      %v551 = vunpack.c.l.s4 1966171168
      %v552 = vunpack.c.0.s8 %v551
      %v553 = vlaneseq
      %v554 = vshrl.u32 %v553, 7
      %v555 = vsub.s32 %v552, %v554
      %v556 = vrot.slane %v549, %v555
      %v558 = vunpack.c.l.s4 1966171168
      %v559 = vunpack.c.0.s8 %v558
      %v560 = vlaneseq
      %v561 = vshrl.u32 %v560, 7
      %v562 = vsub.s32 %v559, %v561
      %v563 = vrot.slane %v556, %v562
      %v564 = vcombine.high %v563, %v563
      %s566 = scalar_lea.vmem [#allocation2], 64
      %567 = vst.msk [vmem:[%s566] ss:$8 sm:$0x3] %vm467, %v564
      %568 = vst.msk [vmem:[%s566] ss:$8 sm:$0x0] %vm467, %v564
      %v571 = vcombine.low %v432, %v433
      %v573 = vunpack.c.l.s4 1966171168
      %v574 = vunpack.c.0.s8 %v573
      %v575 = vlaneseq
      %v576 = vshrl.u32 %v575, 7
      %v577 = vsub.s32 %v574, %v576
      %v578 = vrot.slane %v571, %v577
      %v579 = vcombine.high %v578, %v578
      %v581 = vunpack.c.l.s4 1966171168
      %v582 = vunpack.c.0.s8 %v581
      %v583 = vlaneseq
      %v584 = vshrl.u32 %v583, 7
      %v585 = vsub.s32 %v582, %v584
      %v586 = vrot.slane %v579, %v585
      %v587 = vcombine.high %v586, %v586
      %s589 = scalar_lea.vmem [#allocation2], 80
      %590 = vst.msk [vmem:[%s589] ss:$8 sm:$0x3] %vm467, %v587
      %591 = vst.msk [vmem:[%s589] ss:$8 sm:$0x0] %vm467, %v587
      %v592 = vrot.slane %v432, 1
      %v593 = vrot.slane %v433, 1
      %v596 = vmul.f32 %v430, %v592
      %v597 = vmul.f32 %v431, %v593
      %v600 = vcombine.low %v596, %v597
      %v602 = vunpack.c.l.s4 1966171168
      %v603 = vunpack.c.0.s8 %v602
      %v604 = vlaneseq
      %v605 = vshrl.u32 %v604, 7
      %v606 = vsub.s32 %v603, %v605
      %v607 = vrot.slane %v600, %v606
      %v609 = vunpack.c.l.s4 1966171168
      %v610 = vunpack.c.0.s8 %v609
      %v611 = vlaneseq
      %v612 = vshrl.u32 %v611, 7
      %v613 = vsub.s32 %v610, %v612
      %v614 = vrot.slane %v607, %v613
      %v615 = vcombine.high %v614, %v614
      %s617 = scalar_lea.vmem [#allocation2], 96
      %618 = vst.msk [vmem:[%s617] ss:$8 sm:$0x3] %vm467, %v615
      %619 = vst.msk [vmem:[%s617] ss:$8 sm:$0x0] %vm467, %v615
      %s620 = scalar_lea.vmem [#allocation2], 112
      %621 = vst.msk [vmem:[%s620] ss:$8 sm:$0x3] %vm467, %v379
      %622 = vst.msk [vmem:[%s620] ss:$8 sm:$0x0] %vm467, %v379
      %s623 = scalar_lea.vmem %s326, 32
      %v624 = vld [vmem:[%s623] sm:$0x3]
      %v625 = vld [vmem:[%s623 + $0x8] sm:$0x3]
      %v626 = vld [vmem:[%s623] sm:$0xc]
      %v627 = vld [vmem:[%s623 + $0x8] sm:$0xc]
      %s628 = scalar_lea.vmem %s623, 4
      %v629 = vld [vmem:[%s628] ss:$8 sm:$0x3]
      %v630 = vxor.u32 %v624, 2147483648
      %v631 = vxor.u32 %v625, 2147483648
      %v632 = vmul.f32 %v630, 1.442695
      %v633 = vpow.pop %v632
      %v634 = vmul.f32 %v631, 1.442695
      %v635 = vpow.pop %v634
      %v636 = vadd.f32 %v633, 1.0
      %v637 = vadd.f32 %v635, 1.0
      %v638 = vrcp.pop %v636
      %v639 = vmul.f32 1.0, %v638
      %v640 = vrcp.pop %v637
      %v641 = vmul.f32 1.0, %v640
      %v642 = vxor.u32 %v629, 2147483648
      %v643 = vmul.f32 %v642, 1.442695
      %v644 = vpow.pop %v643
      %v645 = vadd.f32 %v644, 1.0
      %v646 = vrcp.pop %v645
      %v647 = vmul.f32 1.0, %v646
      %v648 = vmul.f32 %v626, 1.442695
      %v649 = vpow.pop %v648
      %v650 = vmul.f32 %v627, 1.442695
      %v651 = vpow.pop %v650
      %v652 = vsub.f32 %v639, 0.5
      %v653 = vsub.f32 %v641, 0.5
      %v654 = vmul.f32 %v652, %v652
      %v655 = vmul.f32 %v653, %v653
      %v656 = vsel %vm388, %v654, 0.0
      %v657 = vsel %vm388, %v655, 0.0
      %v658 = vadd.f32 %v656, %v657
      %659 = vadd.xlane.f32.xlu0 %v658
      %v660 = vpop.xlane.xlu0 %659
      %v661 = vmul.f32 %v626, %v626
      %v662 = vmul.f32 %v627, %v627
      %v663 = vsel %vm396, %v661, 0.0
      %v664 = vsel %vm396, %v662, 0.0
      %v665 = vadd.f32 %v663, %v664
      %666 = vadd.xlane.f32.xlu0 %v665
      %v667 = vpop.xlane.xlu0 %666
      %v668 = vadd.f32 %v402, %v660
      %v669 = vadd.f32 %v403, %v667
      %v670 = vadd.f32 %v639, %v408
      %v671 = vadd.f32 %v641, %v412
      %v672 = vadd.f32 %v639, %v421
      %v673 = vadd.f32 %v641, %v425
      %v674 = vmul.f32 %v649, 3.19275
      %v675 = vmul.f32 %v651, 3.19275
      %v676 = vmul.f32 %v649, 4.00944
      %v677 = vmul.f32 %v651, 4.00944
      %v678 = vmul.f32 %v674, 0.5
      %v679 = vmul.f32 %v675, 0.5
      %v680 = vmul.f32 %v676, 0.5
      %v681 = vmul.f32 %v677, 0.5
      %v684 = vrot.slane %v678, 2
      %v685 = vrot.slane %v679, 2
      %v688 = vsub.f32 %v670, %v684
      %v689 = vsub.f32 %v671, %v685
      %v692 = vcombine.low %v688, %v689
      %v694 = vunpack.c.l.s4 1966171168
      %v695 = vunpack.c.0.s8 %v694
      %v696 = vlaneseq
      %v697 = vshrl.u32 %v696, 7
      %v698 = vsub.s32 %v695, %v697
      %v699 = vrot.slane %v692, %v698
      %v701 = vunpack.c.l.s4 1966171168
      %v702 = vunpack.c.0.s8 %v701
      %v703 = vlaneseq
      %v704 = vshrl.u32 %v703, 7
      %v705 = vsub.s32 %v702, %v704
      %v706 = vrot.slane %v699, %v705
      %s708 = scalar_lea.vmem [#allocation2], 1
      %709 = vst.msk [vmem:[%s708] ss:$8 sm:$0x3] %vm467, %v706
      %710 = vst.msk [vmem:[%s708] ss:$8 sm:$0x0] %vm467, %v706
      %v711 = vadd.f32 %v670, %v684
      %v712 = vadd.f32 %v671, %v685
      %v715 = vcombine.low %v711, %v712
      %v717 = vunpack.c.l.s4 1966171168
      %v718 = vunpack.c.0.s8 %v717
      %v719 = vlaneseq
      %v720 = vshrl.u32 %v719, 7
      %v721 = vsub.s32 %v718, %v720
      %v722 = vrot.slane %v715, %v721
      %v724 = vunpack.c.l.s4 1966171168
      %v725 = vunpack.c.0.s8 %v724
      %v726 = vlaneseq
      %v727 = vshrl.u32 %v726, 7
      %v728 = vsub.s32 %v725, %v727
      %v729 = vrot.slane %v722, %v728
      %s731 = scalar_lea.vmem [#allocation2], 17
      %732 = vst.msk [vmem:[%s731] ss:$8 sm:$0x3] %vm467, %v729
      %733 = vst.msk [vmem:[%s731] ss:$8 sm:$0x0] %vm467, %v729
      %v736 = vrot.slane %v680, 2
      %v737 = vrot.slane %v681, 2
      %v740 = vsub.f32 %v672, %v736
      %v741 = vsub.f32 %v673, %v737
      %v744 = vcombine.low %v740, %v741
      %v746 = vunpack.c.l.s4 1966171168
      %v747 = vunpack.c.0.s8 %v746
      %v748 = vlaneseq
      %v749 = vshrl.u32 %v748, 7
      %v750 = vsub.s32 %v747, %v749
      %v751 = vrot.slane %v744, %v750
      %v752 = vcombine.high %v751, %v751
      %v754 = vunpack.c.l.s4 1966171168
      %v755 = vunpack.c.0.s8 %v754
      %v756 = vlaneseq
      %v757 = vshrl.u32 %v756, 7
      %v758 = vsub.s32 %v755, %v757
      %v759 = vrot.slane %v752, %v758
      %s761 = scalar_lea.vmem [#allocation2], 33
      %762 = vst.msk [vmem:[%s761] ss:$8 sm:$0x3] %vm467, %v759
      %763 = vst.msk [vmem:[%s761] ss:$8 sm:$0x0] %vm467, %v759
      %v764 = vadd.f32 %v672, %v736
      %v765 = vadd.f32 %v673, %v737
      %v768 = vcombine.low %v764, %v765
      %v770 = vunpack.c.l.s4 1966171168
      %v771 = vunpack.c.0.s8 %v770
      %v772 = vlaneseq
      %v773 = vshrl.u32 %v772, 7
      %v774 = vsub.s32 %v771, %v773
      %v775 = vrot.slane %v768, %v774
      %v776 = vcombine.high %v775, %v775
      %v778 = vunpack.c.l.s4 1966171168
      %v779 = vunpack.c.0.s8 %v778
      %v780 = vlaneseq
      %v781 = vshrl.u32 %v780, 7
      %v782 = vsub.s32 %v779, %v781
      %v783 = vrot.slane %v776, %v782
      %s785 = scalar_lea.vmem [#allocation2], 49
      %786 = vst.msk [vmem:[%s785] ss:$8 sm:$0x3] %vm467, %v783
      %787 = vst.msk [vmem:[%s785] ss:$8 sm:$0x0] %vm467, %v783
      %v790 = vcombine.low %v674, %v675
      %v792 = vunpack.c.l.s4 1966171168
      %v793 = vunpack.c.0.s8 %v792
      %v794 = vlaneseq
      %v795 = vshrl.u32 %v794, 7
      %v796 = vsub.s32 %v793, %v795
      %v797 = vrot.slane %v790, %v796
      %v799 = vunpack.c.l.s4 1966171168
      %v800 = vunpack.c.0.s8 %v799
      %v801 = vlaneseq
      %v802 = vshrl.u32 %v801, 7
      %v803 = vsub.s32 %v800, %v802
      %v804 = vrot.slane %v797, %v803
      %v805 = vcombine.high %v804, %v804
      %s807 = scalar_lea.vmem [#allocation2], 65
      %808 = vst.msk [vmem:[%s807] ss:$8 sm:$0x3] %vm467, %v805
      %809 = vst.msk [vmem:[%s807] ss:$8 sm:$0x0] %vm467, %v805
      %v812 = vcombine.low %v676, %v677
      %v814 = vunpack.c.l.s4 1966171168
      %v815 = vunpack.c.0.s8 %v814
      %v816 = vlaneseq
      %v817 = vshrl.u32 %v816, 7
      %v818 = vsub.s32 %v815, %v817
      %v819 = vrot.slane %v812, %v818
      %v820 = vcombine.high %v819, %v819
      %v822 = vunpack.c.l.s4 1966171168
      %v823 = vunpack.c.0.s8 %v822
      %v824 = vlaneseq
      %v825 = vshrl.u32 %v824, 7
      %v826 = vsub.s32 %v823, %v825
      %v827 = vrot.slane %v820, %v826
      %v828 = vcombine.high %v827, %v827
      %s830 = scalar_lea.vmem [#allocation2], 81
      %831 = vst.msk [vmem:[%s830] ss:$8 sm:$0x3] %vm467, %v828
      %832 = vst.msk [vmem:[%s830] ss:$8 sm:$0x0] %vm467, %v828
      %v833 = vrot.slane %v676, 1
      %v834 = vrot.slane %v677, 1
      %v837 = vmul.f32 %v674, %v833
      %v838 = vmul.f32 %v675, %v834
      %v841 = vcombine.low %v837, %v838
      %v843 = vunpack.c.l.s4 1966171168
      %v844 = vunpack.c.0.s8 %v843
      %v845 = vlaneseq
      %v846 = vshrl.u32 %v845, 7
      %v847 = vsub.s32 %v844, %v846
      %v848 = vrot.slane %v841, %v847
      %v850 = vunpack.c.l.s4 1966171168
      %v851 = vunpack.c.0.s8 %v850
      %v852 = vlaneseq
      %v853 = vshrl.u32 %v852, 7
      %v854 = vsub.s32 %v851, %v853
      %v855 = vrot.slane %v848, %v854
      %v856 = vcombine.high %v855, %v855
      %s858 = scalar_lea.vmem [#allocation2], 97
      %859 = vst.msk [vmem:[%s858] ss:$8 sm:$0x3] %vm467, %v856
      %860 = vst.msk [vmem:[%s858] ss:$8 sm:$0x0] %vm467, %v856
      %s861 = scalar_lea.vmem [#allocation2], 113
      %862 = vst.msk [vmem:[%s861] ss:$8 sm:$0x3] %vm467, %v647
      %863 = vst.msk [vmem:[%s861] ss:$8 sm:$0x0] %vm467, %v647
      %s864 = scalar_lea.vmem %s326, 64
      %v865 = vld [vmem:[%s864] sm:$0x3]
      %v866 = vld [vmem:[%s864 + $0x8] sm:$0x3]
      %v867 = vld [vmem:[%s864] sm:$0xc]
      %v868 = vld [vmem:[%s864 + $0x8] sm:$0xc]
      %s869 = scalar_lea.vmem %s864, 4
      %v870 = vld [vmem:[%s869] ss:$8 sm:$0x3]
      %v871 = vxor.u32 %v865, 2147483648
      %v872 = vxor.u32 %v866, 2147483648
      %v873 = vmul.f32 %v871, 1.442695
      %v874 = vpow.pop %v873
      %v875 = vmul.f32 %v872, 1.442695
      %v876 = vpow.pop %v875
      %v877 = vadd.f32 %v874, 1.0
      %v878 = vadd.f32 %v876, 1.0
      %v879 = vrcp.pop %v877
      %v880 = vmul.f32 1.0, %v879
      %v881 = vrcp.pop %v878
      %v882 = vmul.f32 1.0, %v881
      %v883 = vxor.u32 %v870, 2147483648
      %v884 = vmul.f32 %v883, 1.442695
      %v885 = vpow.pop %v884
      %v886 = vadd.f32 %v885, 1.0
      %v887 = vrcp.pop %v886
      %v888 = vmul.f32 1.0, %v887
      %v889 = vmul.f32 %v867, 1.442695
      %v890 = vpow.pop %v889
      %v891 = vmul.f32 %v868, 1.442695
      %v892 = vpow.pop %v891
      %v893 = vsub.f32 %v880, 0.5
      %v894 = vsub.f32 %v882, 0.5
      %v895 = vmul.f32 %v893, %v893
      %v896 = vmul.f32 %v894, %v894
      %v897 = vsel %vm388, %v895, 0.0
      %v898 = vsel %vm388, %v896, 0.0
      %v899 = vadd.f32 %v897, %v898
      %900 = vadd.xlane.f32.xlu0 %v899
      %v901 = vpop.xlane.xlu0 %900
      %v902 = vmul.f32 %v867, %v867
      %v903 = vmul.f32 %v868, %v868
      %v904 = vsel %vm396, %v902, 0.0
      %v905 = vsel %vm396, %v903, 0.0
      %v906 = vadd.f32 %v904, %v905
      %907 = vadd.xlane.f32.xlu0 %v906
      %v908 = vpop.xlane.xlu0 %907
      %v909 = vadd.f32 %v668, %v901
      %v910 = vadd.f32 %v669, %v908
      %v911 = vadd.f32 %v880, %v408
      %v912 = vadd.f32 %v882, %v412
      %v913 = vadd.f32 %v880, %v421
      %v914 = vadd.f32 %v882, %v425
      %v915 = vmul.f32 %v890, 5.05587
      %v916 = vmul.f32 %v892, 5.05587
      %v917 = vmul.f32 %v890, 8.09892
      %v918 = vmul.f32 %v892, 8.09892
      %v919 = vmul.f32 %v915, 0.5
      %v920 = vmul.f32 %v916, 0.5
      %v921 = vmul.f32 %v917, 0.5
      %v922 = vmul.f32 %v918, 0.5
      %v925 = vrot.slane %v919, 2
      %v926 = vrot.slane %v920, 2
      %v929 = vsub.f32 %v911, %v925
      %v930 = vsub.f32 %v912, %v926
      %v933 = vcombine.low %v929, %v930
      %v935 = vunpack.c.l.s4 1966171168
      %v936 = vunpack.c.0.s8 %v935
      %v937 = vlaneseq
      %v938 = vshrl.u32 %v937, 7
      %v939 = vsub.s32 %v936, %v938
      %v940 = vrot.slane %v933, %v939
      %v942 = vunpack.c.l.s4 1966171168
      %v943 = vunpack.c.0.s8 %v942
      %v944 = vlaneseq
      %v945 = vshrl.u32 %v944, 7
      %v946 = vsub.s32 %v943, %v945
      %v947 = vrot.slane %v940, %v946
      %s949 = scalar_lea.vmem [#allocation2], 2
      %950 = vst.msk [vmem:[%s949] ss:$8 sm:$0x3] %vm467, %v947
      %951 = vst.msk [vmem:[%s949] ss:$8 sm:$0x0] %vm467, %v947
      %v952 = vadd.f32 %v911, %v925
      %v953 = vadd.f32 %v912, %v926
      %v956 = vcombine.low %v952, %v953
      %v958 = vunpack.c.l.s4 1966171168
      %v959 = vunpack.c.0.s8 %v958
      %v960 = vlaneseq
      %v961 = vshrl.u32 %v960, 7
      %v962 = vsub.s32 %v959, %v961
      %v963 = vrot.slane %v956, %v962
      %v965 = vunpack.c.l.s4 1966171168
      %v966 = vunpack.c.0.s8 %v965
      %v967 = vlaneseq
      %v968 = vshrl.u32 %v967, 7
      %v969 = vsub.s32 %v966, %v968
      %v970 = vrot.slane %v963, %v969
      %s972 = scalar_lea.vmem [#allocation2], 18
      %973 = vst.msk [vmem:[%s972] ss:$8 sm:$0x3] %vm467, %v970
      %974 = vst.msk [vmem:[%s972] ss:$8 sm:$0x0] %vm467, %v970
      %v977 = vrot.slane %v921, 2
      %v978 = vrot.slane %v922, 2
      %v981 = vsub.f32 %v913, %v977
      %v982 = vsub.f32 %v914, %v978
      %v985 = vcombine.low %v981, %v982
      %v987 = vunpack.c.l.s4 1966171168
      %v988 = vunpack.c.0.s8 %v987
      %v989 = vlaneseq
      %v990 = vshrl.u32 %v989, 7
      %v991 = vsub.s32 %v988, %v990
      %v992 = vrot.slane %v985, %v991
      %v993 = vcombine.high %v992, %v992
      %v995 = vunpack.c.l.s4 1966171168
      %v996 = vunpack.c.0.s8 %v995
      %v997 = vlaneseq
      %v998 = vshrl.u32 %v997, 7
      %v999 = vsub.s32 %v996, %v998
      %v1000 = vrot.slane %v993, %v999
      %s1002 = scalar_lea.vmem [#allocation2], 34
      %1003 = vst.msk [vmem:[%s1002] ss:$8 sm:$0x3] %vm467, %v1000
      %1004 = vst.msk [vmem:[%s1002] ss:$8 sm:$0x0] %vm467, %v1000
      %v1005 = vadd.f32 %v913, %v977
      %v1006 = vadd.f32 %v914, %v978
      %v1009 = vcombine.low %v1005, %v1006
      %v1011 = vunpack.c.l.s4 1966171168
      %v1012 = vunpack.c.0.s8 %v1011
      %v1013 = vlaneseq
      %v1014 = vshrl.u32 %v1013, 7
      %v1015 = vsub.s32 %v1012, %v1014
      %v1016 = vrot.slane %v1009, %v1015
      %v1017 = vcombine.high %v1016, %v1016
      %v1019 = vunpack.c.l.s4 1966171168
      %v1020 = vunpack.c.0.s8 %v1019
      %v1021 = vlaneseq
      %v1022 = vshrl.u32 %v1021, 7
      %v1023 = vsub.s32 %v1020, %v1022
      %v1024 = vrot.slane %v1017, %v1023
      %s1026 = scalar_lea.vmem [#allocation2], 50
      %1027 = vst.msk [vmem:[%s1026] ss:$8 sm:$0x3] %vm467, %v1024
      %1028 = vst.msk [vmem:[%s1026] ss:$8 sm:$0x0] %vm467, %v1024
      %v1031 = vcombine.low %v915, %v916
      %v1033 = vunpack.c.l.s4 1966171168
      %v1034 = vunpack.c.0.s8 %v1033
      %v1035 = vlaneseq
      %v1036 = vshrl.u32 %v1035, 7
      %v1037 = vsub.s32 %v1034, %v1036
      %v1038 = vrot.slane %v1031, %v1037
      %v1040 = vunpack.c.l.s4 1966171168
      %v1041 = vunpack.c.0.s8 %v1040
      %v1042 = vlaneseq
      %v1043 = vshrl.u32 %v1042, 7
      %v1044 = vsub.s32 %v1041, %v1043
      %v1045 = vrot.slane %v1038, %v1044
      %v1046 = vcombine.high %v1045, %v1045
      %s1048 = scalar_lea.vmem [#allocation2], 66
      %1049 = vst.msk [vmem:[%s1048] ss:$8 sm:$0x3] %vm467, %v1046
      %1050 = vst.msk [vmem:[%s1048] ss:$8 sm:$0x0] %vm467, %v1046
      %v1053 = vcombine.low %v917, %v918
      %v1055 = vunpack.c.l.s4 1966171168
      %v1056 = vunpack.c.0.s8 %v1055
      %v1057 = vlaneseq
      %v1058 = vshrl.u32 %v1057, 7
      %v1059 = vsub.s32 %v1056, %v1058
      %v1060 = vrot.slane %v1053, %v1059
      %v1061 = vcombine.high %v1060, %v1060
      %v1063 = vunpack.c.l.s4 1966171168
      %v1064 = vunpack.c.0.s8 %v1063
      %v1065 = vlaneseq
      %v1066 = vshrl.u32 %v1065, 7
      %v1067 = vsub.s32 %v1064, %v1066
      %v1068 = vrot.slane %v1061, %v1067
      %v1069 = vcombine.high %v1068, %v1068
      %s1071 = scalar_lea.vmem [#allocation2], 82
      %1072 = vst.msk [vmem:[%s1071] ss:$8 sm:$0x3] %vm467, %v1069
      %1073 = vst.msk [vmem:[%s1071] ss:$8 sm:$0x0] %vm467, %v1069
      %v1074 = vrot.slane %v917, 1
      %v1075 = vrot.slane %v918, 1
      %v1078 = vmul.f32 %v915, %v1074
      %v1079 = vmul.f32 %v916, %v1075
      %v1082 = vcombine.low %v1078, %v1079
      %v1084 = vunpack.c.l.s4 1966171168
      %v1085 = vunpack.c.0.s8 %v1084
      %v1086 = vlaneseq
      %v1087 = vshrl.u32 %v1086, 7
      %v1088 = vsub.s32 %v1085, %v1087
      %v1089 = vrot.slane %v1082, %v1088
      %v1091 = vunpack.c.l.s4 1966171168
      %v1092 = vunpack.c.0.s8 %v1091
      %v1093 = vlaneseq
      %v1094 = vshrl.u32 %v1093, 7
      %v1095 = vsub.s32 %v1092, %v1094
      %v1096 = vrot.slane %v1089, %v1095
      %v1097 = vcombine.high %v1096, %v1096
      %s1099 = scalar_lea.vmem [#allocation2], 98
      %1100 = vst.msk [vmem:[%s1099] ss:$8 sm:$0x3] %vm467, %v1097
      %1101 = vst.msk [vmem:[%s1099] ss:$8 sm:$0x0] %vm467, %v1097
      %s1102 = scalar_lea.vmem [#allocation2], 114
      %1103 = vst.msk [vmem:[%s1102] ss:$8 sm:$0x3] %vm467, %v888
      %1104 = vst.msk [vmem:[%s1102] ss:$8 sm:$0x0] %vm467, %v888
      %s1105 = scalar_lea.vmem %s326, 96
      %v1106 = vld [vmem:[%s1105] sm:$0x3]
      %v1107 = vld [vmem:[%s1105 + $0x8] sm:$0x3]
      %v1108 = vld [vmem:[%s1105] sm:$0xc]
      %v1109 = vld [vmem:[%s1105 + $0x8] sm:$0xc]
      %s1110 = scalar_lea.vmem %s1105, 4
      %v1111 = vld [vmem:[%s1110] ss:$8 sm:$0x3]
      %v1112 = vxor.u32 %v1106, 2147483648
      %v1113 = vxor.u32 %v1107, 2147483648
      %v1114 = vmul.f32 %v1112, 1.442695
      %v1115 = vpow.pop %v1114
      %v1116 = vmul.f32 %v1113, 1.442695
      %v1117 = vpow.pop %v1116
      %v1118 = vadd.f32 %v1115, 1.0
      %v1119 = vadd.f32 %v1117, 1.0
      %v1120 = vrcp.pop %v1118
      %v1121 = vmul.f32 1.0, %v1120
      %v1122 = vrcp.pop %v1119
      %v1123 = vmul.f32 1.0, %v1122
      %v1124 = vxor.u32 %v1111, 2147483648
      %v1125 = vmul.f32 %v1124, 1.442695
      %v1126 = vpow.pop %v1125
      %v1127 = vadd.f32 %v1126, 1.0
      %v1128 = vrcp.pop %v1127
      %v1129 = vmul.f32 1.0, %v1128
      %v1130 = vmul.f32 %v1108, 1.442695
      %v1131 = vpow.pop %v1130
      %v1132 = vmul.f32 %v1109, 1.442695
      %v1133 = vpow.pop %v1132
      %v1134 = vsub.f32 %v1121, 0.5
      %v1135 = vsub.f32 %v1123, 0.5
      %v1136 = vmul.f32 %v1134, %v1134
      %v1137 = vmul.f32 %v1135, %v1135
      %v1138 = vsel %vm388, %v1136, 0.0
      %v1139 = vsel %vm388, %v1137, 0.0
      %v1140 = vadd.f32 %v1138, %v1139
      %1141 = vadd.xlane.f32.xlu0 %v1140
      %v1142 = vpop.xlane.xlu0 %1141
      %v1143 = vmul.f32 %v1108, %v1108
      %v1144 = vmul.f32 %v1109, %v1109
      %v1145 = vsel %vm396, %v1143, 0.0
      %v1146 = vsel %vm396, %v1144, 0.0
      %v1147 = vadd.f32 %v1145, %v1146
      %1148 = vadd.xlane.f32.xlu0 %v1147
      %v1149 = vpop.xlane.xlu0 %1148
      %v1150 = vadd.f32 %v909, %v1142
      %v1151 = vadd.f32 %v910, %v1149
      %v1152 = vadd.f32 %v1121, %v408
      %v1153 = vadd.f32 %v1123, %v412
      %v1154 = vadd.f32 %v1121, %v421
      %v1155 = vadd.f32 %v1123, %v425
      %v1156 = vmul.f32 %v1131, 9.47112
      %v1157 = vmul.f32 %v1133, 9.47112
      %v1158 = vmul.f32 %v1131, 4.84053
      %v1159 = vmul.f32 %v1133, 4.84053
      %v1160 = vmul.f32 %v1156, 0.5
      %v1161 = vmul.f32 %v1157, 0.5
      %v1162 = vmul.f32 %v1158, 0.5
      %v1163 = vmul.f32 %v1159, 0.5
      %v1166 = vrot.slane %v1160, 2
      %v1167 = vrot.slane %v1161, 2
      %v1170 = vsub.f32 %v1152, %v1166
      %v1171 = vsub.f32 %v1153, %v1167
      %v1174 = vcombine.low %v1170, %v1171
      %v1176 = vunpack.c.l.s4 1966171168
      %v1177 = vunpack.c.0.s8 %v1176
      %v1178 = vlaneseq
      %v1179 = vshrl.u32 %v1178, 7
      %v1180 = vsub.s32 %v1177, %v1179
      %v1181 = vrot.slane %v1174, %v1180
      %v1183 = vunpack.c.l.s4 1966171168
      %v1184 = vunpack.c.0.s8 %v1183
      %v1185 = vlaneseq
      %v1186 = vshrl.u32 %v1185, 7
      %v1187 = vsub.s32 %v1184, %v1186
      %v1188 = vrot.slane %v1181, %v1187
      %s1190 = scalar_lea.vmem [#allocation2], 3
      %1191 = vst.msk [vmem:[%s1190] ss:$8 sm:$0x3] %vm467, %v1188
      %1192 = vst.msk [vmem:[%s1190] ss:$8 sm:$0x0] %vm467, %v1188
      %v1193 = vadd.f32 %v1152, %v1166
      %v1194 = vadd.f32 %v1153, %v1167
      %v1197 = vcombine.low %v1193, %v1194
      %v1199 = vunpack.c.l.s4 1966171168
      %v1200 = vunpack.c.0.s8 %v1199
      %v1201 = vlaneseq
      %v1202 = vshrl.u32 %v1201, 7
      %v1203 = vsub.s32 %v1200, %v1202
      %v1204 = vrot.slane %v1197, %v1203
      %v1206 = vunpack.c.l.s4 1966171168
      %v1207 = vunpack.c.0.s8 %v1206
      %v1208 = vlaneseq
      %v1209 = vshrl.u32 %v1208, 7
      %v1210 = vsub.s32 %v1207, %v1209
      %v1211 = vrot.slane %v1204, %v1210
      %s1213 = scalar_lea.vmem [#allocation2], 19
      %1214 = vst.msk [vmem:[%s1213] ss:$8 sm:$0x3] %vm467, %v1211
      %1215 = vst.msk [vmem:[%s1213] ss:$8 sm:$0x0] %vm467, %v1211
      %v1218 = vrot.slane %v1162, 2
      %v1219 = vrot.slane %v1163, 2
      %v1222 = vsub.f32 %v1154, %v1218
      %v1223 = vsub.f32 %v1155, %v1219
      %v1226 = vcombine.low %v1222, %v1223
      %v1228 = vunpack.c.l.s4 1966171168
      %v1229 = vunpack.c.0.s8 %v1228
      %v1230 = vlaneseq
      %v1231 = vshrl.u32 %v1230, 7
      %v1232 = vsub.s32 %v1229, %v1231
      %v1233 = vrot.slane %v1226, %v1232
      %v1234 = vcombine.high %v1233, %v1233
      %v1236 = vunpack.c.l.s4 1966171168
      %v1237 = vunpack.c.0.s8 %v1236
      %v1238 = vlaneseq
      %v1239 = vshrl.u32 %v1238, 7
      %v1240 = vsub.s32 %v1237, %v1239
      %v1241 = vrot.slane %v1234, %v1240
      %s1243 = scalar_lea.vmem [#allocation2], 35
      %1244 = vst.msk [vmem:[%s1243] ss:$8 sm:$0x3] %vm467, %v1241
      %1245 = vst.msk [vmem:[%s1243] ss:$8 sm:$0x0] %vm467, %v1241
      %v1246 = vadd.f32 %v1154, %v1218
      %v1247 = vadd.f32 %v1155, %v1219
      %v1250 = vcombine.low %v1246, %v1247
      %v1252 = vunpack.c.l.s4 1966171168
      %v1253 = vunpack.c.0.s8 %v1252
      %v1254 = vlaneseq
      %v1255 = vshrl.u32 %v1254, 7
      %v1256 = vsub.s32 %v1253, %v1255
      %v1257 = vrot.slane %v1250, %v1256
      %v1258 = vcombine.high %v1257, %v1257
      %v1260 = vunpack.c.l.s4 1966171168
      %v1261 = vunpack.c.0.s8 %v1260
      %v1262 = vlaneseq
      %v1263 = vshrl.u32 %v1262, 7
      %v1264 = vsub.s32 %v1261, %v1263
      %v1265 = vrot.slane %v1258, %v1264
      %s1267 = scalar_lea.vmem [#allocation2], 51
      %1268 = vst.msk [vmem:[%s1267] ss:$8 sm:$0x3] %vm467, %v1265
      %1269 = vst.msk [vmem:[%s1267] ss:$8 sm:$0x0] %vm467, %v1265
      %v1272 = vcombine.low %v1156, %v1157
      %v1274 = vunpack.c.l.s4 1966171168
      %v1275 = vunpack.c.0.s8 %v1274
      %v1276 = vlaneseq
      %v1277 = vshrl.u32 %v1276, 7
      %v1278 = vsub.s32 %v1275, %v1277
      %v1279 = vrot.slane %v1272, %v1278
      %v1281 = vunpack.c.l.s4 1966171168
      %v1282 = vunpack.c.0.s8 %v1281
      %v1283 = vlaneseq
      %v1284 = vshrl.u32 %v1283, 7
      %v1285 = vsub.s32 %v1282, %v1284
      %v1286 = vrot.slane %v1279, %v1285
      %v1287 = vcombine.high %v1286, %v1286
      %s1289 = scalar_lea.vmem [#allocation2], 67
      %1290 = vst.msk [vmem:[%s1289] ss:$8 sm:$0x3] %vm467, %v1287
      %1291 = vst.msk [vmem:[%s1289] ss:$8 sm:$0x0] %vm467, %v1287
      %v1294 = vcombine.low %v1158, %v1159
      %v1296 = vunpack.c.l.s4 1966171168
      %v1297 = vunpack.c.0.s8 %v1296
      %v1298 = vlaneseq
      %v1299 = vshrl.u32 %v1298, 7
      %v1300 = vsub.s32 %v1297, %v1299
      %v1301 = vrot.slane %v1294, %v1300
      %v1302 = vcombine.high %v1301, %v1301
      %v1304 = vunpack.c.l.s4 1966171168
      %v1305 = vunpack.c.0.s8 %v1304
      %v1306 = vlaneseq
      %v1307 = vshrl.u32 %v1306, 7
      %v1308 = vsub.s32 %v1305, %v1307
      %v1309 = vrot.slane %v1302, %v1308
      %v1310 = vcombine.high %v1309, %v1309
      %s1312 = scalar_lea.vmem [#allocation2], 83
      %1313 = vst.msk [vmem:[%s1312] ss:$8 sm:$0x3] %vm467, %v1310
      %1314 = vst.msk [vmem:[%s1312] ss:$8 sm:$0x0] %vm467, %v1310
      %v1315 = vrot.slane %v1158, 1
      %v1316 = vrot.slane %v1159, 1
      %v1319 = vmul.f32 %v1156, %v1315
      %v1320 = vmul.f32 %v1157, %v1316
      %v1323 = vcombine.low %v1319, %v1320
      %v1325 = vunpack.c.l.s4 1966171168
      %v1326 = vunpack.c.0.s8 %v1325
      %v1327 = vlaneseq
      %v1328 = vshrl.u32 %v1327, 7
      %v1329 = vsub.s32 %v1326, %v1328
      %v1330 = vrot.slane %v1323, %v1329
      %v1332 = vunpack.c.l.s4 1966171168
      %v1333 = vunpack.c.0.s8 %v1332
      %v1334 = vlaneseq
      %v1335 = vshrl.u32 %v1334, 7
      %v1336 = vsub.s32 %v1333, %v1335
      %v1337 = vrot.slane %v1330, %v1336
      %v1338 = vcombine.high %v1337, %v1337
      %s1340 = scalar_lea.vmem [#allocation2], 99
      %1341 = vst.msk [vmem:[%s1340] ss:$8 sm:$0x3] %vm467, %v1338
      %1342 = vst.msk [vmem:[%s1340] ss:$8 sm:$0x0] %vm467, %v1338
      %s1343 = scalar_lea.vmem [#allocation2], 115
      %1344 = vst.msk [vmem:[%s1343] ss:$8 sm:$0x3] %vm467, %v1129
      %1345 = vst.msk [vmem:[%s1343] ss:$8 sm:$0x0] %vm467, %v1129
      %s1346 = scalar_lea.vmem %s326, 128
      %v1347 = vld [vmem:[%s1346] sm:$0x3]
      %v1348 = vld [vmem:[%s1346 + $0x8] sm:$0x3]
      %v1349 = vld [vmem:[%s1346] sm:$0xc]
      %v1350 = vld [vmem:[%s1346 + $0x8] sm:$0xc]
      %s1351 = scalar_lea.vmem %s1346, 4
      %v1352 = vld [vmem:[%s1351] ss:$8 sm:$0x3]
      %v1353 = vxor.u32 %v1347, 2147483648
      %v1354 = vxor.u32 %v1348, 2147483648
      %v1355 = vmul.f32 %v1353, 1.442695
      %v1356 = vpow.pop %v1355
      %v1357 = vmul.f32 %v1354, 1.442695
      %v1358 = vpow.pop %v1357
      %v1359 = vadd.f32 %v1356, 1.0
      %v1360 = vadd.f32 %v1358, 1.0
      %v1361 = vrcp.pop %v1359
      %v1362 = vmul.f32 1.0, %v1361
      %v1363 = vrcp.pop %v1360
      %v1364 = vmul.f32 1.0, %v1363
      %v1365 = vxor.u32 %v1352, 2147483648
      %v1366 = vmul.f32 %v1365, 1.442695
      %v1367 = vpow.pop %v1366
      %v1368 = vadd.f32 %v1367, 1.0
      %v1369 = vrcp.pop %v1368
      %v1370 = vmul.f32 1.0, %v1369
      %v1371 = vmul.f32 %v1349, 1.442695
      %v1372 = vpow.pop %v1371
      %v1373 = vmul.f32 %v1350, 1.442695
      %v1374 = vpow.pop %v1373
      %v1375 = vsub.f32 %v1362, 0.5
      %v1376 = vsub.f32 %v1364, 0.5
      %v1377 = vmul.f32 %v1375, %v1375
      %v1378 = vmul.f32 %v1376, %v1376
      %v1379 = vsel %vm388, %v1377, 0.0
      %v1380 = vsel %vm388, %v1378, 0.0
      %v1381 = vadd.f32 %v1379, %v1380
      %1382 = vadd.xlane.f32.xlu0 %v1381
      %v1383 = vpop.xlane.xlu0 %1382
      %v1384 = vmul.f32 %v1349, %v1349
      %v1385 = vmul.f32 %v1350, %v1350
      %v1386 = vsel %vm396, %v1384, 0.0
      %v1387 = vsel %vm396, %v1385, 0.0
      %v1388 = vadd.f32 %v1386, %v1387
      %1389 = vadd.xlane.f32.xlu0 %v1388
      %v1390 = vpop.xlane.xlu0 %1389
      %v1391 = vadd.f32 %v1150, %v1383
      %v1392 = vadd.f32 %v1151, %v1390
      %v1393 = vadd.f32 %v1362, %v408
      %v1394 = vadd.f32 %v1364, %v412
      %v1395 = vadd.f32 %v1362, %v421
      %v1396 = vadd.f32 %v1364, %v425
      %v1397 = vmul.f32 %v1372, 11.2364
      %v1398 = vmul.f32 %v1374, 11.2364
      %v1399 = vmul.f32 %v1372, 10.0071
      %v1400 = vmul.f32 %v1374, 10.0071
      %v1401 = vmul.f32 %v1397, 0.5
      %v1402 = vmul.f32 %v1398, 0.5
      %v1403 = vmul.f32 %v1399, 0.5
      %v1404 = vmul.f32 %v1400, 0.5
      %v1407 = vrot.slane %v1401, 2
      %v1408 = vrot.slane %v1402, 2
      %v1411 = vsub.f32 %v1393, %v1407
      %v1412 = vsub.f32 %v1394, %v1408
      %v1415 = vcombine.low %v1411, %v1412
      %v1417 = vunpack.c.l.s4 1966171168
      %v1418 = vunpack.c.0.s8 %v1417
      %v1419 = vlaneseq
      %v1420 = vshrl.u32 %v1419, 7
      %v1421 = vsub.s32 %v1418, %v1420
      %v1422 = vrot.slane %v1415, %v1421
      %v1424 = vunpack.c.l.s4 1966171168
      %v1425 = vunpack.c.0.s8 %v1424
      %v1426 = vlaneseq
      %v1427 = vshrl.u32 %v1426, 7
      %v1428 = vsub.s32 %v1425, %v1427
      %v1429 = vrot.slane %v1422, %v1428
      %s1431 = scalar_lea.vmem [#allocation2], 4
      %1432 = vst.msk [vmem:[%s1431] ss:$8 sm:$0x3] %vm467, %v1429
      %1433 = vst.msk [vmem:[%s1431] ss:$8 sm:$0x0] %vm467, %v1429
      %v1434 = vadd.f32 %v1393, %v1407
      %v1435 = vadd.f32 %v1394, %v1408
      %v1438 = vcombine.low %v1434, %v1435
      %v1440 = vunpack.c.l.s4 1966171168
      %v1441 = vunpack.c.0.s8 %v1440
      %v1442 = vlaneseq
      %v1443 = vshrl.u32 %v1442, 7
      %v1444 = vsub.s32 %v1441, %v1443
      %v1445 = vrot.slane %v1438, %v1444
      %v1447 = vunpack.c.l.s4 1966171168
      %v1448 = vunpack.c.0.s8 %v1447
      %v1449 = vlaneseq
      %v1450 = vshrl.u32 %v1449, 7
      %v1451 = vsub.s32 %v1448, %v1450
      %v1452 = vrot.slane %v1445, %v1451
      %s1454 = scalar_lea.vmem [#allocation2], 20
      %1455 = vst.msk [vmem:[%s1454] ss:$8 sm:$0x3] %vm467, %v1452
      %1456 = vst.msk [vmem:[%s1454] ss:$8 sm:$0x0] %vm467, %v1452
      %v1459 = vrot.slane %v1403, 2
      %v1460 = vrot.slane %v1404, 2
      %v1463 = vsub.f32 %v1395, %v1459
      %v1464 = vsub.f32 %v1396, %v1460
      %v1467 = vcombine.low %v1463, %v1464
      %v1469 = vunpack.c.l.s4 1966171168
      %v1470 = vunpack.c.0.s8 %v1469
      %v1471 = vlaneseq
      %v1472 = vshrl.u32 %v1471, 7
      %v1473 = vsub.s32 %v1470, %v1472
      %v1474 = vrot.slane %v1467, %v1473
      %v1475 = vcombine.high %v1474, %v1474
      %v1477 = vunpack.c.l.s4 1966171168
      %v1478 = vunpack.c.0.s8 %v1477
      %v1479 = vlaneseq
      %v1480 = vshrl.u32 %v1479, 7
      %v1481 = vsub.s32 %v1478, %v1480
      %v1482 = vrot.slane %v1475, %v1481
      %s1484 = scalar_lea.vmem [#allocation2], 36
      %1485 = vst.msk [vmem:[%s1484] ss:$8 sm:$0x3] %vm467, %v1482
      %1486 = vst.msk [vmem:[%s1484] ss:$8 sm:$0x0] %vm467, %v1482
      %v1487 = vadd.f32 %v1395, %v1459
      %v1488 = vadd.f32 %v1396, %v1460
      %v1491 = vcombine.low %v1487, %v1488
      %v1493 = vunpack.c.l.s4 1966171168
      %v1494 = vunpack.c.0.s8 %v1493
      %v1495 = vlaneseq
      %v1496 = vshrl.u32 %v1495, 7
      %v1497 = vsub.s32 %v1494, %v1496
      %v1498 = vrot.slane %v1491, %v1497
      %v1499 = vcombine.high %v1498, %v1498
      %v1501 = vunpack.c.l.s4 1966171168
      %v1502 = vunpack.c.0.s8 %v1501
      %v1503 = vlaneseq
      %v1504 = vshrl.u32 %v1503, 7
      %v1505 = vsub.s32 %v1502, %v1504
      %v1506 = vrot.slane %v1499, %v1505
      %s1508 = scalar_lea.vmem [#allocation2], 52
      %1509 = vst.msk [vmem:[%s1508] ss:$8 sm:$0x3] %vm467, %v1506
      %1510 = vst.msk [vmem:[%s1508] ss:$8 sm:$0x0] %vm467, %v1506
      %v1513 = vcombine.low %v1397, %v1398
      %v1515 = vunpack.c.l.s4 1966171168
      %v1516 = vunpack.c.0.s8 %v1515
      %v1517 = vlaneseq
      %v1518 = vshrl.u32 %v1517, 7
      %v1519 = vsub.s32 %v1516, %v1518
      %v1520 = vrot.slane %v1513, %v1519
      %v1522 = vunpack.c.l.s4 1966171168
      %v1523 = vunpack.c.0.s8 %v1522
      %v1524 = vlaneseq
      %v1525 = vshrl.u32 %v1524, 7
      %v1526 = vsub.s32 %v1523, %v1525
      %v1527 = vrot.slane %v1520, %v1526
      %v1528 = vcombine.high %v1527, %v1527
      %s1530 = scalar_lea.vmem [#allocation2], 68
      %1531 = vst.msk [vmem:[%s1530] ss:$8 sm:$0x3] %vm467, %v1528
      %1532 = vst.msk [vmem:[%s1530] ss:$8 sm:$0x0] %vm467, %v1528
      %v1535 = vcombine.low %v1399, %v1400
      %v1537 = vunpack.c.l.s4 1966171168
      %v1538 = vunpack.c.0.s8 %v1537
      %v1539 = vlaneseq
      %v1540 = vshrl.u32 %v1539, 7
      %v1541 = vsub.s32 %v1538, %v1540
      %v1542 = vrot.slane %v1535, %v1541
      %v1543 = vcombine.high %v1542, %v1542
      %v1545 = vunpack.c.l.s4 1966171168
      %v1546 = vunpack.c.0.s8 %v1545
      %v1547 = vlaneseq
      %v1548 = vshrl.u32 %v1547, 7
      %v1549 = vsub.s32 %v1546, %v1548
      %v1550 = vrot.slane %v1543, %v1549
      %v1551 = vcombine.high %v1550, %v1550
      %s1553 = scalar_lea.vmem [#allocation2], 84
      %1554 = vst.msk [vmem:[%s1553] ss:$8 sm:$0x3] %vm467, %v1551
      %1555 = vst.msk [vmem:[%s1553] ss:$8 sm:$0x0] %vm467, %v1551
      %v1556 = vrot.slane %v1399, 1
      %v1557 = vrot.slane %v1400, 1
      %v1560 = vmul.f32 %v1397, %v1556
      %v1561 = vmul.f32 %v1398, %v1557
      %v1564 = vcombine.low %v1560, %v1561
      %v1566 = vunpack.c.l.s4 1966171168
      %v1567 = vunpack.c.0.s8 %v1566
      %v1568 = vlaneseq
      %v1569 = vshrl.u32 %v1568, 7
      %v1570 = vsub.s32 %v1567, %v1569
      %v1571 = vrot.slane %v1564, %v1570
      %v1573 = vunpack.c.l.s4 1966171168
      %v1574 = vunpack.c.0.s8 %v1573
      %v1575 = vlaneseq
      %v1576 = vshrl.u32 %v1575, 7
      %v1577 = vsub.s32 %v1574, %v1576
      %v1578 = vrot.slane %v1571, %v1577
      %v1579 = vcombine.high %v1578, %v1578
      %s1581 = scalar_lea.vmem [#allocation2], 100
      %1582 = vst.msk [vmem:[%s1581] ss:$8 sm:$0x3] %vm467, %v1579
      %1583 = vst.msk [vmem:[%s1581] ss:$8 sm:$0x0] %vm467, %v1579
      %s1584 = scalar_lea.vmem [#allocation2], 116
      %1585 = vst.msk [vmem:[%s1584] ss:$8 sm:$0x3] %vm467, %v1370
      %1586 = vst.msk [vmem:[%s1584] ss:$8 sm:$0x0] %vm467, %v1370
      %v1587 = vld [vmem:[#allocation2] sm:$0x1f]
      %v1588 = vld [vmem:[#allocation2 + $0x8] sm:$0x1f]
      %v1589 = vld [vmem:[#allocation2 + $0x10] sm:$0x1f]
      %v1590 = vld [vmem:[#allocation2 + $0x18] sm:$0x1f]
      %v1591 = vld [vmem:[#allocation2 + $0x20] sm:$0x1f]
      %v1592 = vld [vmem:[#allocation2 + $0x28] sm:$0x1f]
      %v1593 = vld [vmem:[#allocation2 + $0x30] sm:$0x1f]
      %v1594 = vld [vmem:[#allocation2 + $0x38] sm:$0x1f]
      %v1595 = vld [vmem:[#allocation2 + $0x40] sm:$0x1f]
      %v1596 = vld [vmem:[#allocation2 + $0x48] sm:$0x1f]
      %v1597 = vld [vmem:[#allocation2 + $0x50] sm:$0x1f]
      %v1598 = vld [vmem:[#allocation2 + $0x58] sm:$0x1f]
      %v1599 = vld [vmem:[#allocation2 + $0x60] sm:$0x1f]
      %v1600 = vld [vmem:[#allocation2 + $0x68] sm:$0x1f]
      %v1601 = vld [vmem:[#allocation2 + $0x70] sm:$0x1f]
      %v1602 = vld [vmem:[#allocation2 + $0x78] sm:$0x1f]
      %s1603 = sld [smem:[#allocation4 + %s34]]
      // While loop
      $region33: #{region_loss.1} parent=27 // loop_pre_header
        _
      $region34: #{region_loss.1} parent=27 // loop_header
        %s1605 = sphi 0, %s1607
        %p1606 = scmp.ge.s32.totalorder %s1605, %s1603
        %v1610 = vphi 1.0, %v1705
        %v1611 = vphi 1.0, %v1706
      $region35: #{region_loss.1} parent=27 // loop_header_branch
        %1609 = sbr.rel (%p1606) target = $region39
      $region36: #{region_loss.1} parent=27 // loop_body
        %s1612 = sshra.s32 %s1605, 7
        %s1613 = sand.u32 %s1605, 127
        %s1614 = sshra.s32 %s34, 1
        %s1615 = sand.u32 %s34, 1
        %s1616 = smul.u32 %s1614, 2
        %s1617 = sadd.s32 %s1612, %s1616
        %s1618 = smul.u32 %s1617, 256
        %s1619 = sshra.s32 %s34, 1
        %s1620 = sand.u32 %s34, 1
        %s1621 = sshra.s32 %s1605, 7
        %s1622 = sand.u32 %s1605, 127
        %s1623 = smul.u32 %s1620, 128
        %s1624 = sadd.s32 %s1623, %s1622
        %s1625 = sadd.s32 %s1618, %s1624
        %s1626 = sld [smem:[#allocation5 + %s1625]]
        %s1627 = sadd.s32 %s1605, 50
        %s1628 = sshra.s32 %s1627, 7
        %s1629 = sand.u32 %s1627, 127
        %s1630 = sadd.s32 %s1628, %s1616
        %s1631 = smul.u32 %s1630, 256
        %s1632 = sshra.s32 %s1627, 7
        %s1633 = sand.u32 %s1627, 127
        %s1634 = sadd.s32 %s1623, %s1633
        %s1635 = sadd.s32 %s1631, %s1634
        %s1636 = sld [smem:[#allocation5 + %s1635]]
        %s1637 = sadd.s32 %s1605, 100
        %s1638 = sshra.s32 %s1637, 7
        %s1639 = sand.u32 %s1637, 127
        %s1640 = sadd.s32 %s1638, %s1616
        %s1641 = smul.u32 %s1640, 256
        %s1642 = sshra.s32 %s1637, 7
        %s1643 = sand.u32 %s1637, 127
        %s1644 = sadd.s32 %s1623, %s1643
        %s1645 = sadd.s32 %s1641, %s1644
        %s1646 = sld [smem:[#allocation5 + %s1645]]
        %s1647 = sadd.s32 %s1605, 150
        %s1648 = sshra.s32 %s1647, 7
        %s1649 = sand.u32 %s1647, 127
        %s1650 = sadd.s32 %s1648, %s1616
        %s1651 = smul.u32 %s1650, 256
        %s1652 = sshra.s32 %s1647, 7
        %s1653 = sand.u32 %s1647, 127
        %s1654 = sadd.s32 %s1623, %s1653
        %s1655 = sadd.s32 %s1651, %s1654
        %s1656 = sld [smem:[#allocation5 + %s1655]]
        %s1657 = smul.f32 %s1646, 0.5
        %s1658 = smul.f32 %s1656, 0.5
        %s1659 = ssub.f32 %s1626, %s1657
        %v1660 = vstv %s1659
        %v1661 = vmin.f32 %v1587, %v1660
        %v1662 = vmin.f32 %v1588, %v1660
        %s1663 = sadd.f32 %s1626, %s1657
        %v1664 = vstv %s1663
        %v1665 = vmax.f32 %v1589, %v1664
        %v1666 = vmax.f32 %v1590, %v1664
        %s1667 = ssub.f32 %s1636, %s1658
        %v1668 = vstv %s1667
        %v1669 = vmin.f32 %v1591, %v1668
        %v1670 = vmin.f32 %v1592, %v1668
        %s1671 = sadd.f32 %s1636, %s1658
        %v1672 = vstv %s1671
        %v1673 = vmax.f32 %v1593, %v1672
        %v1674 = vmax.f32 %v1594, %v1672
        %v1675 = vstv %s1646
        %v1676 = vadd.f32 %v1595, %v1675
        %v1677 = vadd.f32 %v1596, %v1675
        %v1678 = vsub.f32 %v1665, %v1661
        %v1679 = vsub.f32 %v1666, %v1662
        %v1680 = vsub.f32 %v1676, %v1678
        %v1681 = vsub.f32 %v1677, %v1679
        %v1682 = vstv %s1656
        %v1683 = vadd.f32 %v1597, %v1682
        %v1684 = vadd.f32 %v1598, %v1682
        %v1685 = vsub.f32 %v1673, %v1669
        %v1686 = vsub.f32 %v1674, %v1670
        %v1687 = vsub.f32 %v1683, %v1685
        %v1688 = vsub.f32 %v1684, %v1686
        %v1689 = vmax.f32 %v1680, 0.0
        %v1690 = vmax.f32 %v1681, 0.0
        %v1691 = vmax.f32 %v1687, 0.0
        %v1692 = vmax.f32 %v1688, 0.0
        %v1693 = vmul.f32 %v1689, %v1691
        %v1694 = vmul.f32 %v1690, %v1692
        %s1695 = smul.f32 %s1646, %s1656
        %v1696 = vstv %s1695
        %v1697 = vadd.f32 %v1599, %v1696
        %v1698 = vadd.f32 %v1600, %v1696
        %v1699 = vsub.f32 %v1697, %v1693
        %v1700 = vsub.f32 %v1698, %v1694
        %v1701 = vmul.f32 %v1699, 0.6
        %v1702 = vmul.f32 %v1700, 0.6
        %vm1703 = vcmp.gt.f32.partialorder %v1693, %v1701
        %vm1704 = vcmp.gt.f32.partialorder %v1694, %v1702
        %v1705 = vsel %vm1703, 0.0, %v1610
        %v1706 = vsel %vm1704, 0.0, %v1611
      $region37: #{region_loss.1} parent=27 // loop_footer
        %s1607 = sadd.s32 %s1605, 1
      $region38: #{region_loss.1} parent=27 // loop_footer_branch
        %1604 = sbr.rel target = $region34
      $region39: #{region_loss.1} parent=27 // loop_exit
        _
      %v1707 = vmul.f32 %v1610, %v1601
      %v1708 = vmul.f32 %v1611, %v1602
      %v1709 = vmul.f32 %v1707, %v1601
      %v1710 = vmul.f32 %v1708, %v1602
      %vm1711 = vcmask 1044480
      %v1712 = vsel %vm1711, %v1709, 0.0
      %v1713 = vsel %vm1711, %v1710, 0.0
      %v1714 = vadd.f32 %v1712, %v1713
      %1715 = vadd.xlane.f32.xlu0 %v1714
      %v1716 = vpop.xlane.xlu0 %1715
      %v1717 = vsel %vm1711, %v1716, 0.0
      %v1718 = vrot.slane %v1717, 4
      %v1719 = vadd.f32 %v1717, %v1718
      %v1720 = vrot.slane %v1719, 2
      %v1721 = vadd.f32 %v1719, %v1720
      %v1722 = vrot.slane %v1721, 1
      %v1723 = vadd.f32 %v1721, %v1722
      %v1724 = vld [vmem:[%s330] sm:$0x1]
      %v1725 = vadd.f32 %v1724, %v1391
      %vm1726 = vcmask 0
      %1727 = vst.msk [vmem:[%s330] sm:$0x1] %vm1726, %v1725
      %v1728 = vld [vmem:[%s333] sm:$0x1]
      %v1730 = vlaneseq
      %v1731 = vshrl.u32 %v1730, 7
      %v1732 = vsub.s32 1, %v1731
      %v1733 = vrot.slane %v1391, %v1732
      %v1735 = vadd.f32 %v1728, %v1733
      %1736 = vst.msk [vmem:[%s333] sm:$0x1] %vm1726, %v1735
      %v1737 = vld [vmem:[%s336] sm:$0x1]
      %v1739 = vlaneseq
      %v1740 = vshrl.u32 %v1739, 7
      %v1741 = vsub.s32 2, %v1740
      %v1742 = vrot.slane %v1392, %v1741
      %v1744 = vadd.f32 %v1737, %v1742
      %1745 = vst.msk [vmem:[%s336] sm:$0x1] %vm1726, %v1744
      %v1746 = vld [vmem:[%s339] sm:$0x1]
      %v1747 = vlaneseq
      %v1748 = vshrl.u32 %v1747, 7
      %v1749 = vsub.s32 3, %v1748
      %v1750 = vrot.slane %v1392, %v1749
      %v1752 = vadd.f32 %v1746, %v1750
      %1753 = vst.msk [vmem:[%s339] sm:$0x1] %vm1726, %v1752
      %v1754 = vld [vmem:[%s342] sm:$0x1]
      %v1755 = vadd.f32 %v1754, %v1723
      %1756 = vst.msk [vmem:[%s342] sm:$0x1] %vm1726, %v1755
      %p1757 = scmp.lt.s32.totalorder %s34, 1
      %s1758 = scalar_select %p1757, %s34, 1
      %s1759 = scalar_lea.vmem %s4, %s1758
      %p1760 = scmp.lt.s32.totalorder %s34, 1
      %s1761 = scalar_select %p1760, %s34, 1
      %s1762 = scalar_lea.vmem %s5, %s1761
      %p1763 = scmp.lt.s32.totalorder %s34, 1
      %s1764 = scalar_select %p1763, %s34, 1
      %s1765 = scalar_lea.vmem %s6, %s1764
      %p1766 = scmp.lt.s32.totalorder %s34, 1
      %s1767 = scalar_select %p1766, %s34, 1
      %s1768 = scalar_lea.vmem %s7, %s1767
      %p1769 = scmp.lt.s32.totalorder %s34, 1
      %s1770 = scalar_select %p1769, %s34, 1
      %s1771 = scalar_lea.vmem %s8, %s1770
      // Predicated region
      $region40: #{region_loss.1} parent=27 // pred_check
        %p1772 = pneg %p114
      $region41: #{region_loss.1} parent=27 // pred_check_branch
        %1774 = sbr.rel (%p1772) target = $region43
      $region42: #{region_loss.1} parent=27 // pred_region
        _
      $region43: #{region_loss.1} parent=27 // pred_fallthru
        _
      // Predicated region
      $region44: #{region_loss.1} parent=27 // pred_check
        %p1775 = pneg %p140
      $region45: #{region_loss.1} parent=27 // pred_check_branch
        %1777 = sbr.rel (%p1775) target = $region47
      $region46: #{region_loss.1} parent=27 // pred_region
        _
      $region47: #{region_loss.1} parent=27 // pred_fallthru
        _
      // Predicated region
      $region48: #{region_loss.1} parent=27 // pred_check
        %p1778 = pneg %p166
      $region49: #{region_loss.1} parent=27 // pred_check_branch
        %1780 = sbr.rel (%p1778) target = $region51
      $region50: #{region_loss.1} parent=27 // pred_region
        _
      $region51: #{region_loss.1} parent=27 // pred_fallthru
        _
      // Predicated region
      $region52: #{region_loss.1} parent=27 // pred_check
        %p1781 = pneg %p192
      $region53: #{region_loss.1} parent=27 // pred_check_branch
        %1783 = sbr.rel (%p1781) target = $region55
      $region54: #{region_loss.1} parent=27 // pred_region
        _
      $region55: #{region_loss.1} parent=27 // pred_fallthru
        _
      // Predicated region
      $region56: #{region_loss.1} parent=27 // pred_check
        %p1784 = pneg %p218
      $region57: #{region_loss.1} parent=27 // pred_check_branch
        %1786 = sbr.rel (%p1784) target = $region59
      $region58: #{region_loss.1} parent=27 // pred_region
        _
      $region59: #{region_loss.1} parent=27 // pred_fallthru
        _
    $region28: #{region_loss.1} parent=5 // pred_fallthru
      _
    %p1787 = scmp.le.s32.totalorder 2, %s25
    // Predicated region
    $region60: #{region_loss.1} parent=5 // pred_check
      %p1788 = pneg %p1787
    $region61: #{region_loss.1} parent=5 // pred_check_branch
      %1790 = sbr.rel (%p1788) target = $region63
    $region62: #{region_loss.1} parent=5 // pred_region
      %s1791 = ssub.s32 %s25, 2
      // Predicated region
      $region64: #{region_loss.1} parent=62 // pred_check
        %p1792 = pneg %p120
      $region65: #{region_loss.1} parent=62 // pred_check_branch
        %1794 = sbr.rel (%p1792) target = $region67
      $region66: #{region_loss.1} parent=62 // pred_region
        %p1795 = scmp.lt.s32.totalorder %s36, 1
        %s1796 = scalar_select %p1795, %s36, 1
        %s1797 = scalar_lea.vmem %s4, %s1796
      $region67: #{region_loss.1} parent=62 // pred_fallthru
        _
      // Predicated region
      $region68: #{region_loss.1} parent=62 // pred_check
        %p1798 = pneg %p146
      $region69: #{region_loss.1} parent=62 // pred_check_branch
        %1800 = sbr.rel (%p1798) target = $region71
      $region70: #{region_loss.1} parent=62 // pred_region
        %p1801 = scmp.lt.s32.totalorder %s36, 1
        %s1802 = scalar_select %p1801, %s36, 1
        %s1803 = scalar_lea.vmem %s5, %s1802
      $region71: #{region_loss.1} parent=62 // pred_fallthru
        _
      // Predicated region
      $region72: #{region_loss.1} parent=62 // pred_check
        %p1804 = pneg %p172
      $region73: #{region_loss.1} parent=62 // pred_check_branch
        %1806 = sbr.rel (%p1804) target = $region75
      $region74: #{region_loss.1} parent=62 // pred_region
        %p1807 = scmp.lt.s32.totalorder %s36, 1
        %s1808 = scalar_select %p1807, %s36, 1
        %s1809 = scalar_lea.vmem %s6, %s1808
      $region75: #{region_loss.1} parent=62 // pred_fallthru
        _
      // Predicated region
      $region76: #{region_loss.1} parent=62 // pred_check
        %p1810 = pneg %p198
      $region77: #{region_loss.1} parent=62 // pred_check_branch
        %1812 = sbr.rel (%p1810) target = $region79
      $region78: #{region_loss.1} parent=62 // pred_region
        %p1813 = scmp.lt.s32.totalorder %s36, 1
        %s1814 = scalar_select %p1813, %s36, 1
        %s1815 = scalar_lea.vmem %s7, %s1814
      $region79: #{region_loss.1} parent=62 // pred_fallthru
        _
      // Predicated region
      $region80: #{region_loss.1} parent=62 // pred_check
        %p1816 = pneg %p224
      $region81: #{region_loss.1} parent=62 // pred_check_branch
        %1818 = sbr.rel (%p1816) target = $region83
      $region82: #{region_loss.1} parent=62 // pred_region
        %p1819 = scmp.lt.s32.totalorder %s36, 1
        %s1820 = scalar_select %p1819, %s36, 1
        %s1821 = scalar_lea.vmem %s8, %s1820
      $region83: #{region_loss.1} parent=62 // pred_fallthru
        _
    $region63: #{region_loss.1} parent=5 // pred_fallthru
      _
  $region6: #{region_loss.1} parent=0 // loop_footer
    %s29 = sadd.s32 1, %s25
  $region7: #{region_loss.1} parent=0 // loop_footer_branch
    %24 = sbr.rel target = $region3
  $region8: #{region_loss.1} parent=0 // loop_exit
    _

</llo_original>
